<compile_context>
chip_gen: v7x
topology: tpu7x:2x2x1
jax: 0.10.0
libtpu: 0.0.40
codegen_flags: <defaults>
</compile_context>

<pallas_src>
import math
from functools import partial

import numpy as np
import jax
import jax.numpy as jnp
from jax.experimental import pallas as pl
from jax.experimental.pallas import tpu as pltpu


def _layernorm(x, gamma, beta, eps):
    mean = jnp.mean(x, axis=-1, keepdims=True)
    var = jnp.mean((x - mean) ** 2, axis=-1, keepdims=True)
    return (x - mean) * jax.lax.rsqrt(var + eps) * gamma + beta


def _transformer_block_kernel(
    # inputs
    xq_ref, xf_ref, cosq_ref, sinq_ref, cosk_ref, sink_ref,
    wqeo_ref, wqoe_ref, wkeo_ref, wkoe_ref, wv_ref, wo_ref,
    w1_ref, b1_ref, w2_ref, b2_ref,
    g1_ref, be1_ref, g2_ref, be2_ref,
    # outputs
    y_ref,
    # scratch (persist across grid iterations)
    k_scr, v_scr, hout_scr,
    *, n_head, n_kv_head, head_dim, eps, causal, compute_dtype, ffn_chunk,
    approx_recip):
    f32 = jnp.float32
    cd = compute_dtype

    xq = xq_ref[0]                       # (tq, C) query tile, f32
    tq, C = xq.shape
    T = xf_ref.shape[1]
    hd = head_dim
    n_rep = n_head // n_kv_head
    q_idx = pl.program_id(1)
    q_start = q_idx * tq

    g1, be1 = g1_ref[...], be1_ref[...]

    # -------- K/V: computed once per batch element (q tile 0), cached in VMEM --------
    @pl.when(q_idx == 0)
    def _prepare_kv():
        h_f = _layernorm(xf_ref[0], g1, be1, eps)                  # (T, C) f32 VPU
        hf_c = h_f.astype(cd)
        k_eo = jnp.dot(hf_c, wkeo_ref[...], preferred_element_type=f32)
        k_oe = jnp.dot(hf_c, wkoe_ref[...], preferred_element_type=f32)
        cos_k = jnp.concatenate([cosk_ref[...]] * n_kv_head, axis=-1)
        sin_k = jnp.concatenate([sink_ref[...]] * n_kv_head, axis=-1)
        # rotated K in per-head contiguous [A||B] layout, compute dtype
        k_scr[...] = (k_eo * cos_k + k_oe * sin_k).astype(cd)
        v_scr[...] = jnp.dot(hf_c, wv_ref[...], preferred_element_type=f32).astype(cd)

    # -------- Q path for this query tile --------
    h_q = _layernorm(xq, g1, be1, eps)
    hq_c = h_q.astype(cd)
    q_eo = jnp.dot(hq_c, wqeo_ref[...], preferred_element_type=f32)
    q_oe = jnp.dot(hq_c, wqoe_ref[...], preferred_element_type=f32)
    cos_q = jnp.concatenate([cosq_ref[...]] * n_head, axis=-1)
    sin_q = jnp.concatenate([sinq_ref[...]] * n_head, axis=-1)
    q_rot = (q_eo * cos_q + q_oe * sin_q).astype(cd)     # (tq, n_head*hd), per-head [A||B]

    scale = 1.0 / math.sqrt(hd)
    if causal:
        row = jax.lax.broadcasted_iota(jnp.int32, (tq, T), 0) + q_start
        col = jax.lax.broadcasted_iota(jnp.int32, (tq, T), 1)
        keep = row >= col

    # TODO(synk): for n_head >> 8 switch to lax.fori_loop(..., unroll=2..4) with
    #             pl.multiple_of-hinted pl.ds head offsets to bound live ranges.
    # TODO(synk): causal key-range truncation / flash-style streaming for long T.
    for hh in range(n_head):
        kv = hh // n_rep                 # == repeat_interleave(k/v, n_rep, dim=head)
        qh = q_rot[:, hh * hd:(hh + 1) * hd]            # (tq, hd), lane-aligned
        kh = k_scr[:, kv * hd:(kv + 1) * hd]            # (T, hd)  cached rotated K
        vh = v_scr[:, kv * hd:(kv + 1) * hd]            # (T, hd)  cached V
        # single K = head_dim contraction (== qA.kA + qB.kB of the reference)
        s = jax.lax.dot_general(qh, kh, (((1,), (1,)), ((), ())),
                                preferred_element_type=f32) * scale   # (tq, T)
        if causal:
            s = jnp.where(keep, s, -jnp.inf)
        s = s - jnp.max(s, axis=-1, keepdims=True)
        p = jnp.exp(s)
        denom = jnp.sum(p, axis=-1, keepdims=True)
        p = p * pl.reciprocal(denom, approx=approx_recip)
        # TODO(synk): attention-weight dropout (training mode) omitted -> identity.
        oh = jnp.dot(p.astype(cd), vh, preferred_element_type=f32)    # (tq, hd)
        hout_scr[:, hh * hd:(hh + 1) * hd] = oh.astype(cd)

    # single output projection over all heads (compute-dtype operand, no cast)
    attn = jnp.dot(hout_scr[...], wo_ref[...], preferred_element_type=f32)
    x1 = xq + attn                       # residual 1 (f32)

    # -------- LayerNorm 2 + FeedForward (hidden dim in chunks) --------
    h2 = _layernorm(x1, g2_ref[...], be2_ref[...], eps)
    h2_c = h2.astype(cd)
    hidden = w1_ref.shape[1]
    f_out = jnp.zeros((tq, C), f32)
    for c0 in range(0, hidden, ffn_chunk):
        c1 = c0 + ffn_chunk
        f = jnp.dot(h2_c, w1_ref[:, c0:c1], preferred_element_type=f32) + b1_ref[:, c0:c1]
        f = 0.5 * f * (1.0 + jax.lax.erf(f * (1.0 / math.sqrt(2.0))))   # exact (erf) GELU
        f_out = f_out + jnp.dot(f.astype(cd), w2_ref[c0:c1, :],
                                preferred_element_type=f32)
    f_out = f_out + b2_ref[...]

    y_ref[0] = (x1 + f_out).astype(y_ref.dtype)        # residual 2


def _pick_q_tile(T):
    # Returns a tile that divides T. For ragged small T this is T itself (legal:
    # block equals the full dim; may incur sublane padding -- benign).
    for cand in (256, 128):
        if T % cand == 0:
            return cand
    return T


def _eo_col_perms(n_h, hd):
    """Per-head column orders: eo = [even dims || odd dims], oe = [odd || even]."""
    hd2 = hd // 2
    eo = np.empty(n_h * hd, np.int32)
    oe = np.empty(n_h * hd, np.int32)
    for h in range(n_h):
        base = h * hd
        ev = base + 2 * np.arange(hd2)
        od = ev + 1
        eo[base:base + hd2] = ev
        eo[base + hd2:base + hd] = od
        oe[base:base + hd2] = od
        oe[base + hd2:base + hd] = ev
    return eo, oe


def transformer_block(x, params, *, n_head, n_kv_head, eps, mask,
                      compute_dtype=jnp.bfloat16, q_tile=None):
    B, T, C = x.shape
    head_dim = C // n_head
    cd = compute_dtype

    # Compact RoPE tables (T, head_dim); per-head tiling happens in-kernel.
    inv_freq = 1.0 / (10000.0 ** (jnp.arange(0, head_dim, 2, dtype=jnp.float32) / head_dim))
    freqs = jnp.outer(jnp.arange(T, dtype=jnp.float32), inv_freq)     # (T, hd/2)
    cos, sin = jnp.cos(freqs), jnp.sin(freqs)
    cos2 = jnp.concatenate([cos, cos], axis=-1)        # multiplies per-head [q1||q2]
    sinpm = jnp.concatenate([-sin, sin], axis=-1)      # multiplies per-head [q2||q1]

    # Column reorders so rotated q/k land per-head contiguous (single K=hd score dot).
    eo_q, oe_q = _eo_col_perms(n_head, head_dim)
    eo_k, oe_k = _eo_col_perms(n_kv_head, head_dim)
    wqeo = params["wq"][:, eo_q].astype(cd)
    wqoe = params["wq"][:, oe_q].astype(cd)
    wkeo = params["wk"][:, eo_k].astype(cd)
    wkoe = params["wk"][:, oe_k].astype(cd)
    wv = params["wv"].astype(cd)
    wo = params["wo"].astype(cd)
    w1 = params["w1"].astype(cd)
    w2 = params["w2"].astype(cd)

    tq = q_tile or _pick_q_tile(T)
    n_qt = T // tq

    hidden = w1.shape[1]
    ffn_chunk = hidden
    for cand in (2048, 1024):
        if hidden > cand and hidden % cand == 0:
            ffn_chunk = cand
            break

    args = (x, x, cos2, sinpm, cos2, sinpm,
            wqeo, wqoe, wkeo, wkoe, wv, wo,
            w1, params["b1"], w2, params["b2"],
            params["g1"], params["be1"], params["g2"], params["be2"])

    def const_spec(a):
        nd = a.ndim
        # TODO(synk): pipeline_mode=pl.Buffered(1) would drop the redundant second
        #             buffer for these constant-index blocks (v7x VMEM headroom).
        return pl.BlockSpec(a.shape, lambda b, q, _nd=nd: (0,) * _nd)

    in_specs = [
        pl.BlockSpec((1, tq, C), lambda b, q: (b, q, 0)),     # x: query tile
        pl.BlockSpec((1, T, C), lambda b, q: (b, 0, 0)),      # x: full seq (fetched once per b)
        pl.BlockSpec((tq, head_dim), lambda b, q: (q, 0)),    # cos   (query rows)
        pl.BlockSpec((tq, head_dim), lambda b, q: (q, 0)),    # +-sin (query rows)
        pl.BlockSpec((T, head_dim), lambda b, q: (0, 0)),     # cos   (key rows)
        pl.BlockSpec((T, head_dim), lambda b, q: (0, 0)),     # +-sin (key rows)
    ] + [const_spec(a) for a in args[6:]]

    # VMEM budget: double-buffered weights/tables + activation blocks + scratch + temps.
    itemsize_cd = jnp.dtype(cd).itemsize
    weight_bytes = sum(int(np.prod(a.shape)) * jnp.dtype(a.dtype).itemsize
                       for a in args[2:])
    act_bytes = 2 * (tq * C + T * C + 2 * tq * head_dim + tq * C) * 4
    scratch_bytes = (2 * T * n_kv_head * head_dim + tq * n_head * head_dim) * itemsize_cd
    temp_bytes = 4 * (3 * tq * C + 2 * tq * T + 2 * T * n_kv_head * head_dim
                      + 2 * tq * ffn_chunk + 4 * tq * C)
    need = 2 * weight_bytes + act_bytes + scratch_bytes + temp_bytes + (8 << 20)
    try:
        cap = int(getattr(pltpu.get_tpu_info(), "vmem_capacity_bytes", 128 << 20))
    except Exception:
        cap = 64 << 20
    vmem_limit = int(min(max(32 << 20, need), int(cap * 0.85)))
    vmem_limit = max(vmem_limit, 16 << 20)

    kernel = partial(_transformer_block_kernel,
                     n_head=n_head, n_kv_head=n_kv_head, head_dim=head_dim,
                     eps=eps, causal=mask, compute_dtype=cd, ffn_chunk=ffn_chunk,
                     approx_recip=(cd != jnp.float32))

    return pl.pallas_call(
        kernel,
        out_shape=jax.ShapeDtypeStruct((B, T, C), x.dtype),
        grid=(B, n_qt),
        in_specs=in_specs,
        out_specs=pl.BlockSpec((1, tq, C), lambda b, q: (b, q, 0)),
        scratch_shapes=[
            pltpu.VMEM((T, n_kv_head * head_dim), cd),   # rotated K cache (per b)
            pltpu.VMEM((T, n_kv_head * head_dim), cd),   # V cache (per b)
            pltpu.VMEM((tq, n_head * head_dim), cd),     # per-head attention outputs
        ],
        compiler_params=pltpu.CompilerParams(
            # q axis must stay sequential: K/V cache is carried across q tiles.
            # TODO(synk): on v7x with B == 1, split the q (or head) range across
            #             the two TensorCores explicitly instead.
            dimension_semantics=("parallel", "arbitrary"),
            vmem_limit_bytes=vmem_limit),
    )(*args)


# ---------------- pure-JAX reference (mirrors the PyTorch forward) ----------------
def _apply_rope_ref(x, cos, sin):
    x1, x2 = x[..., ::2], x[..., 1::2]
    return jnp.concatenate([x1 * cos - x2 * sin, x1 * sin + x2 * cos], axis=-1)


def reference_block(x, params, *, n_head, n_kv_head, eps, mask):
    B, T, C = x.shape
    hd = C // n_head
    n_rep = n_head // n_kv_head

    def ln(z, g, b):
        m = jnp.mean(z, -1, keepdims=True)
        v = jnp.mean((z - m) ** 2, -1, keepdims=True)
        return (z - m) / jnp.sqrt(v + eps) * g + b

    h = ln(x, params["g1"], params["be1"])
    q = (h @ params["wq"]).reshape(B, T, n_head, hd).transpose(0, 2, 1, 3)
    k = (h @ params["wk"]).reshape(B, T, n_kv_head, hd).transpose(0, 2, 1, 3)
    v = (h @ params["wv"]).reshape(B, T, n_kv_head, hd).transpose(0, 2, 1, 3)

    inv_freq = 1.0 / (10000.0 ** (jnp.arange(0, hd, 2, dtype=jnp.float32) / hd))
    freqs = jnp.outer(jnp.arange(T, dtype=jnp.float32), inv_freq)
    cos, sin = jnp.cos(freqs)[None, None], jnp.sin(freqs)[None, None]
    q, k = _apply_rope_ref(q, cos, sin), _apply_rope_ref(k, cos, sin)

    k = jnp.repeat(k, n_rep, axis=1)
    v = jnp.repeat(v, n_rep, axis=1)
    scores = jnp.einsum("bhtd,bhsd->bhts", q, k) / math.sqrt(hd)
    if mask:
        tril = jnp.tril(jnp.ones((T, T)))
        scores = jnp.where(tril == 0, -jnp.inf, scores)
    w = jax.nn.softmax(scores, axis=-1)
    out = jnp.einsum("bhts,bhsd->bhtd", w, v)
    out = out.transpose(0, 2, 1, 3).reshape(B, T, C)
    x = x + out @ params["wo"]

    h2 = ln(x, params["g2"], params["be2"])
    f = h2 @ params["w1"] + params["b1"]
    f = jax.nn.gelu(f, approximate=False)
    f = f @ params["w2"] + params["b2"]
    return x + f


def init_params(key, d_model, n_head, n_kv_head):
    hd = d_model // n_head
    ks = jax.random.split(key, 12)

    def lin(k, din, dout):
        return jax.random.normal(k, (din, dout), jnp.float32) / math.sqrt(din)

    return dict(
        wq=lin(ks[0], d_model, n_head * hd),
        wk=lin(ks[1], d_model, n_kv_head * hd),
        wv=lin(ks[2], d_model, n_kv_head * hd),
        wo=lin(ks[3], n_head * hd, d_model),
        w1=lin(ks[4], d_model, 4 * d_model),
        b1=0.01 * jax.random.normal(ks[5], (1, 4 * d_model), jnp.float32),
        w2=lin(ks[6], 4 * d_model, d_model),
        b2=0.01 * jax.random.normal(ks[7], (1, d_model), jnp.float32),
        g1=1.0 + 0.05 * jax.random.normal(ks[8], (1, d_model), jnp.float32),
        be1=0.05 * jax.random.normal(ks[9], (1, d_model), jnp.float32),
        g2=1.0 + 0.05 * jax.random.normal(ks[10], (1, d_model), jnp.float32),
        be2=0.05 * jax.random.normal(ks[11], (1, d_model), jnp.float32),
    )


if __name__ == "__main__":
    B, T = 2, 8
    d_model, n_head, n_kv_head = 32, 4, 2
    norm_eps = 1e-5
    # dropout = 0.0 (eval-mode deterministic forward)

    key = jax.random.PRNGKey(0)
    kx, kp = jax.random.split(key)
    x = jax.random.normal(kx, (B, T, d_model), jnp.float32)
    params = init_params(kp, d_model, n_head, n_kv_head)

    y_ref = reference_block(x, params, n_head=n_head, n_kv_head=n_kv_head,
                            eps=norm_eps, mask=True)

    # strict check: f32 MXU operands, exact softmax reciprocal
    y32 = transformer_block(x, params, n_head=n_head, n_kv_head=n_kv_head,
                            eps=norm_eps, mask=True, compute_dtype=jnp.float32)
    y32 = jax.block_until_ready(y32)
    err32 = float(jnp.max(jnp.abs(y32 - y_ref)))
    assert jnp.allclose(y32, y_ref, rtol=1e-2, atol=1e-2), f"f32 path max abs err {err32}"

    # fast path: bf16 MXU operands with f32 accumulation (looser tolerance)
    ybf = transformer_block(x, params, n_head=n_head, n_kv_head=n_kv_head,
                            eps=norm_eps, mask=True, compute_dtype=jnp.bfloat16)
    ybf = jax.block_until_ready(ybf)
    errbf = float(jnp.max(jnp.abs(ybf - y_ref)))
    assert jnp.allclose(ybf, y_ref, rtol=1e-1, atol=1e-1), f"bf16 path max abs err {errbf}"

    print("KERNEL_OK")
</pallas_src>

<mosaic_0001>
module attributes {stable_mosaic.version = 11 : i64} {
  func.func @_transformer_block_kernel(%arg0: i32, %arg1: i32, %arg2: memref<1x8x32xf32, #tpu.memory_space<vmem>>, %arg3: memref<1x8x32xf32, #tpu.memory_space<vmem>>, %arg4: memref<8x8xf32, #tpu.memory_space<vmem>>, %arg5: memref<8x8xf32, #tpu.memory_space<vmem>>, %arg6: memref<8x8xf32, #tpu.memory_space<vmem>>, %arg7: memref<8x8xf32, #tpu.memory_space<vmem>>, %arg8: memref<32x32xf32, #tpu.memory_space<vmem>>, %arg9: memref<32x32xf32, #tpu.memory_space<vmem>>, %arg10: memref<32x16xf32, #tpu.memory_space<vmem>>, %arg11: memref<32x16xf32, #tpu.memory_space<vmem>>, %arg12: memref<32x16xf32, #tpu.memory_space<vmem>>, %arg13: memref<32x32xf32, #tpu.memory_space<vmem>>, %arg14: memref<32x128xf32, #tpu.memory_space<vmem>>, %arg15: memref<1x128xf32, #tpu.memory_space<vmem>>, %arg16: memref<128x32xf32, #tpu.memory_space<vmem>>, %arg17: memref<1x32xf32, #tpu.memory_space<vmem>>, %arg18: memref<1x32xf32, #tpu.memory_space<vmem>>, %arg19: memref<1x32xf32, #tpu.memory_space<vmem>>, %arg20: memref<1x32xf32, #tpu.memory_space<vmem>>, %arg21: memref<1x32xf32, #tpu.memory_space<vmem>>, %arg22: memref<1x8x32xf32, #tpu.memory_space<vmem>>, %arg23: memref<8x16xf32, #tpu.memory_space<vmem>>, %arg24: memref<8x16xf32, #tpu.memory_space<vmem>>, %arg25: memref<8x32xf32, #tpu.memory_space<vmem>>) attributes {dimension_semantics = [#tpu.dimension_semantics<parallel>, #tpu.dimension_semantics<arbitrary>], iteration_bounds = array<i64: 2, 1>, scalar_prefetch = 0 : i64, scratch_operands = 3 : i64, tpu.core_type = #tpu.core_type<tc>, window_params = [{transform_indices = @transform_0, window_bounds = array<i64: 1, 8, 32>}, {transform_indices = @transform_1, window_bounds = array<i64: 1, 8, 32>}, {transform_indices = @transform_2, window_bounds = array<i64: 8, 8>}, {transform_indices = @transform_3, window_bounds = array<i64: 8, 8>}, {pipeline_mode = #tpu.pipeline_mode<synchronous>, transform_indices = @transform_4, window_bounds = array<i64: 8, 8>}, {pipeline_mode = #tpu.pipeline_mode<synchronous>, transform_indices = @transform_5, window_bounds = array<i64: 8, 8>}, {pipeline_mode = #tpu.pipeline_mode<synchronous>, transform_indices = @transform_6, window_bounds = array<i64: 32, 32>}, {pipeline_mode = #tpu.pipeline_mode<synchronous>, transform_indices = @transform_7, window_bounds = array<i64: 32, 32>}, {pipeline_mode = #tpu.pipeline_mode<synchronous>, transform_indices = @transform_8, window_bounds = array<i64: 32, 16>}, {pipeline_mode = #tpu.pipeline_mode<synchronous>, transform_indices = @transform_9, window_bounds = array<i64: 32, 16>}, {pipeline_mode = #tpu.pipeline_mode<synchronous>, transform_indices = @transform_10, window_bounds = array<i64: 32, 16>}, {pipeline_mode = #tpu.pipeline_mode<synchronous>, transform_indices = @transform_11, window_bounds = array<i64: 32, 32>}, {pipeline_mode = #tpu.pipeline_mode<synchronous>, transform_indices = @transform_12, window_bounds = array<i64: 32, 128>}, {pipeline_mode = #tpu.pipeline_mode<synchronous>, transform_indices = @transform_13, window_bounds = array<i64: 1, 128>}, {pipeline_mode = #tpu.pipeline_mode<synchronous>, transform_indices = @transform_14, window_bounds = array<i64: 128, 32>}, {pipeline_mode = #tpu.pipeline_mode<synchronous>, transform_indices = @transform_15, window_bounds = array<i64: 1, 32>}, {pipeline_mode = #tpu.pipeline_mode<synchronous>, transform_indices = @transform_16, window_bounds = array<i64: 1, 32>}, {pipeline_mode = #tpu.pipeline_mode<synchronous>, transform_indices = @transform_17, window_bounds = array<i64: 1, 32>}, {pipeline_mode = #tpu.pipeline_mode<synchronous>, transform_indices = @transform_18, window_bounds = array<i64: 1, 32>}, {pipeline_mode = #tpu.pipeline_mode<synchronous>, transform_indices = @transform_19, window_bounds = array<i64: 1, 32>}, {transform_indices = @transform_20, window_bounds = array<i64: 1, 8, 32>}]} {
    %c0 = arith.constant 0 : index
    %c0_0 = arith.constant 0 : index
    %c0_1 = arith.constant 0 : index
    %0 = vector.load %arg2[%c0, %c0_0, %c0_1] : memref<1x8x32xf32, #tpu.memory_space<vmem>>, vector<1x8x32xf32>
    %1 = vector.shape_cast %0 : vector<1x8x32xf32> to vector<8x32xf32>
    %c8_i32 = arith.constant 8 : i32
    %2 = arith.muli %arg1, %c8_i32 : i32
    %c0_2 = arith.constant 0 : index
    %c0_3 = arith.constant 0 : index
    %3 = vector.load %arg18[%c0_2, %c0_3] : memref<1x32xf32, #tpu.memory_space<vmem>>, vector<1x32xf32>
    %c0_4 = arith.constant 0 : index
    %c0_5 = arith.constant 0 : index
    %4 = vector.load %arg19[%c0_4, %c0_5] : memref<1x32xf32, #tpu.memory_space<vmem>>, vector<1x32xf32>
    %c0_i32 = arith.constant 0 : i32
    %5 = arith.cmpi eq, %arg1, %c0_i32 : i32
    %6 = arith.extui %5 : i1 to i32
    %c0_i32_6 = arith.constant 0 : i32
    %7 = arith.cmpi ne, %6, %c0_i32_6 : i32
    scf.if %7 {
      %c0_97 = arith.constant 0 : index
      %c0_98 = arith.constant 0 : index
      %c0_99 = arith.constant 0 : index
      %178 = vector.load %arg3[%c0_97, %c0_98, %c0_99] : memref<1x8x32xf32, #tpu.memory_space<vmem>>, vector<1x8x32xf32>
      %179 = vector.shape_cast %178 : vector<1x8x32xf32> to vector<8x32xf32>
      %cst_100 = arith.constant dense<0.000000e+00> : vector<8xf32>
      %180 = vector.multi_reduction <add>, %179, %cst_100 [1] : vector<8x32xf32> to vector<8xf32>
      %181 = vector.shape_cast %180 : vector<8xf32> to vector<8x1xf32>
      %cst_101 = arith.constant 3.200000e+01 : f32
      %182 = vector.broadcast %cst_101 : f32 to vector<8x1xf32>
      %183 = arith.divf %181, %182 : vector<8x1xf32>
      %184 = vector.broadcast %183 : vector<8x1xf32> to vector<8x32xf32>
      %185 = arith.subf %179, %184 : vector<8x32xf32>
      %186 = arith.mulf %185, %185 : vector<8x32xf32>
      %cst_102 = arith.constant dense<0.000000e+00> : vector<8xf32>
      %187 = vector.multi_reduction <add>, %186, %cst_102 [1] : vector<8x32xf32> to vector<8xf32>
      %188 = vector.shape_cast %187 : vector<8xf32> to vector<8x1xf32>
      %cst_103 = arith.constant 3.200000e+01 : f32
      %189 = vector.broadcast %cst_103 : f32 to vector<8x1xf32>
      %190 = arith.divf %188, %189 : vector<8x1xf32>
      %191 = vector.broadcast %183 : vector<8x1xf32> to vector<8x32xf32>
      %192 = arith.subf %179, %191 : vector<8x32xf32>
      %cst_104 = arith.constant 9.99999974E-6 : f32
      %193 = vector.broadcast %cst_104 : f32 to vector<8x1xf32>
      %194 = arith.addf %190, %193 : vector<8x1xf32>
      %195 = math.rsqrt %194 : vector<8x1xf32>
      %196 = vector.broadcast %195 : vector<8x1xf32> to vector<8x32xf32>
      %197 = arith.mulf %192, %196 : vector<8x32xf32>
      %198 = vector.broadcast %3 : vector<1x32xf32> to vector<8x32xf32>
      %199 = arith.mulf %197, %198 : vector<8x32xf32>
      %200 = vector.broadcast %4 : vector<1x32xf32> to vector<8x32xf32>
      %201 = arith.addf %199, %200 : vector<8x32xf32>
      %c0_105 = arith.constant 0 : index
      %c0_106 = arith.constant 0 : index
      %202 = vector.load %arg10[%c0_105, %c0_106] : memref<32x16xf32, #tpu.memory_space<vmem>>, vector<32x16xf32>
      %cst_107 = arith.constant dense<0.000000e+00> : vector<8x16xf32>
      %203 = tpu.matmul %201, %202, %cst_107 {dimension_numbers = #tpu.dot_dimension_numbers<[1], [0], [0], [1], [0, 0, 1, 1], [], []>} : vector<8x32xf32>, vector<32x16xf32>, vector<8x16xf32> -> vector<8x16xf32>
      %c0_108 = arith.constant 0 : index
      %c0_109 = arith.constant 0 : index
      %204 = vector.load %arg11[%c0_108, %c0_109] : memref<32x16xf32, #tpu.memory_space<vmem>>, vector<32x16xf32>
      %cst_110 = arith.constant dense<0.000000e+00> : vector<8x16xf32>
      %205 = tpu.matmul %201, %204, %cst_110 {dimension_numbers = #tpu.dot_dimension_numbers<[1], [0], [0], [1], [0, 0, 1, 1], [], []>} : vector<8x32xf32>, vector<32x16xf32>, vector<8x16xf32> -> vector<8x16xf32>
      %c0_111 = arith.constant 0 : index
      %c0_112 = arith.constant 0 : index
      %206 = vector.load %arg6[%c0_111, %c0_112] : memref<8x8xf32, #tpu.memory_space<vmem>>, vector<8x8xf32>
      %207 = tpu.concatenate %206, %206 in 1 : vector<8x8xf32>, vector<8x8xf32> -> vector<8x16xf32>
      %c0_113 = arith.constant 0 : index
      %c0_114 = arith.constant 0 : index
      %208 = vector.load %arg7[%c0_113, %c0_114] : memref<8x8xf32, #tpu.memory_space<vmem>>, vector<8x8xf32>
      %209 = tpu.concatenate %208, %208 in 1 : vector<8x8xf32>, vector<8x8xf32> -> vector<8x16xf32>
      %210 = arith.mulf %203, %207 : vector<8x16xf32>
      %211 = arith.mulf %205, %209 : vector<8x16xf32>
      %212 = arith.addf %210, %211 : vector<8x16xf32>
      %c0_115 = arith.constant 0 : index
      %c0_116 = arith.constant 0 : index
      %213 = vector.load %arg23[%c0_115, %c0_116] : memref<8x16xf32, #tpu.memory_space<vmem>>, vector<8x16xf32>
      tpu.vector_store %arg23[%c0_115, %c0_116], %212 {strides = array<i32>} : memref<8x16xf32, #tpu.memory_space<vmem>>, vector<8x16xf32>,
      %c0_117 = arith.constant 0 : index
      %c0_118 = arith.constant 0 : index
      %214 = vector.load %arg12[%c0_117, %c0_118] : memref<32x16xf32, #tpu.memory_space<vmem>>, vector<32x16xf32>
      %cst_119 = arith.constant dense<0.000000e+00> : vector<8x16xf32>
      %215 = tpu.matmul %201, %214, %cst_119 {dimension_numbers = #tpu.dot_dimension_numbers<[1], [0], [0], [1], [0, 0, 1, 1], [], []>} : vector<8x32xf32>, vector<32x16xf32>, vector<8x16xf32> -> vector<8x16xf32>
      %c0_120 = arith.constant 0 : index
      %c0_121 = arith.constant 0 : index
      %216 = vector.load %arg24[%c0_120, %c0_121] : memref<8x16xf32, #tpu.memory_space<vmem>>, vector<8x16xf32>
      tpu.vector_store %arg24[%c0_120, %c0_121], %215 {strides = array<i32>} : memref<8x16xf32, #tpu.memory_space<vmem>>, vector<8x16xf32>,
    } else {
    }
    %cst = arith.constant dense<0.000000e+00> : vector<8xf32>
    %8 = vector.multi_reduction <add>, %1, %cst [1] : vector<8x32xf32> to vector<8xf32>
    %9 = vector.shape_cast %8 : vector<8xf32> to vector<8x1xf32>
    %cst_7 = arith.constant 3.200000e+01 : f32
    %10 = vector.broadcast %cst_7 : f32 to vector<8x1xf32>
    %11 = arith.divf %9, %10 : vector<8x1xf32>
    %12 = vector.broadcast %11 : vector<8x1xf32> to vector<8x32xf32>
    %13 = arith.subf %1, %12 : vector<8x32xf32>
    %14 = arith.mulf %13, %13 : vector<8x32xf32>
    %cst_8 = arith.constant dense<0.000000e+00> : vector<8xf32>
    %15 = vector.multi_reduction <add>, %14, %cst_8 [1] : vector<8x32xf32> to vector<8xf32>
    %16 = vector.shape_cast %15 : vector<8xf32> to vector<8x1xf32>
    %cst_9 = arith.constant 3.200000e+01 : f32
    %17 = vector.broadcast %cst_9 : f32 to vector<8x1xf32>
    %18 = arith.divf %16, %17 : vector<8x1xf32>
    %19 = vector.broadcast %11 : vector<8x1xf32> to vector<8x32xf32>
    %20 = arith.subf %1, %19 : vector<8x32xf32>
    %cst_10 = arith.constant 9.99999974E-6 : f32
    %21 = vector.broadcast %cst_10 : f32 to vector<8x1xf32>
    %22 = arith.addf %18, %21 : vector<8x1xf32>
    %23 = math.rsqrt %22 : vector<8x1xf32>
    %24 = vector.broadcast %23 : vector<8x1xf32> to vector<8x32xf32>
    %25 = arith.mulf %20, %24 : vector<8x32xf32>
    %26 = vector.broadcast %3 : vector<1x32xf32> to vector<8x32xf32>
    %27 = arith.mulf %25, %26 : vector<8x32xf32>
    %28 = vector.broadcast %4 : vector<1x32xf32> to vector<8x32xf32>
    %29 = arith.addf %27, %28 : vector<8x32xf32>
    %c0_11 = arith.constant 0 : index
    %c0_12 = arith.constant 0 : index
    %30 = vector.load %arg8[%c0_11, %c0_12] : memref<32x32xf32, #tpu.memory_space<vmem>>, vector<32x32xf32>
    %cst_13 = arith.constant dense<0.000000e+00> : vector<8x32xf32>
    %31 = tpu.matmul %29, %30, %cst_13 {dimension_numbers = #tpu.dot_dimension_numbers<[1], [0], [0], [1], [0, 0, 1, 1], [], []>} : vector<8x32xf32>, vector<32x32xf32>, vector<8x32xf32> -> vector<8x32xf32>
    %c0_14 = arith.constant 0 : index
    %c0_15 = arith.constant 0 : index
    %32 = vector.load %arg9[%c0_14, %c0_15] : memref<32x32xf32, #tpu.memory_space<vmem>>, vector<32x32xf32>
    %cst_16 = arith.constant dense<0.000000e+00> : vector<8x32xf32>
    %33 = tpu.matmul %29, %32, %cst_16 {dimension_numbers = #tpu.dot_dimension_numbers<[1], [0], [0], [1], [0, 0, 1, 1], [], []>} : vector<8x32xf32>, vector<32x32xf32>, vector<8x32xf32> -> vector<8x32xf32>
    %c0_17 = arith.constant 0 : index
    %c0_18 = arith.constant 0 : index
    %34 = vector.load %arg4[%c0_17, %c0_18] : memref<8x8xf32, #tpu.memory_space<vmem>>, vector<8x8xf32>
    %35 = tpu.concatenate %34, %34, %34, %34 in 1 : vector<8x8xf32>, vector<8x8xf32>, vector<8x8xf32>, vector<8x8xf32> -> vector<8x32xf32>
    %c0_19 = arith.constant 0 : index
    %c0_20 = arith.constant 0 : index
    %36 = vector.load %arg5[%c0_19, %c0_20] : memref<8x8xf32, #tpu.memory_space<vmem>>, vector<8x8xf32>
    %37 = tpu.concatenate %36, %36, %36, %36 in 1 : vector<8x8xf32>, vector<8x8xf32>, vector<8x8xf32>, vector<8x8xf32> -> vector<8x32xf32>
    %38 = arith.mulf %31, %35 : vector<8x32xf32>
    %39 = arith.mulf %33, %37 : vector<8x32xf32>
    %40 = arith.addf %38, %39 : vector<8x32xf32>
    %41 = tpu.iota {dimensions = array<i32: 0>} : vector<8x8xi32>
    %42 = vector.broadcast %2 : i32 to vector<8x8xi32>
    %43 = arith.addi %41, %42 : vector<8x8xi32>
    %44 = tpu.iota {dimensions = array<i32: 1>} : vector<8x8xi32>
    %45 = arith.cmpi sge, %43, %44 : vector<8x8xi32>
    %46 = vector.extract_strided_slice %40 {offsets = [0, 0], sizes = [8, 8], strides = [1, 1]} : vector<8x32xf32> to vector<8x8xf32>
    %c0_21 = arith.constant 0 : index
    %c0_22 = arith.constant 0 : index
    %47 = vector.load %arg23[%c0_21, %c0_22] : memref<8x16xf32, #tpu.memory_space<vmem>>, vector<8x8xf32>
    %c0_23 = arith.constant 0 : index
    %c0_24 = arith.constant 0 : index
    %48 = vector.load %arg24[%c0_23, %c0_24] : memref<8x16xf32, #tpu.memory_space<vmem>>, vector<8x8xf32>
    %cst_25 = arith.constant dense<0.000000e+00> : vector<8x8xf32>
    %49 = tpu.matmul %46, %47, %cst_25 {dimension_numbers = #tpu.dot_dimension_numbers<[1], [1], [0], [0], [0, 0, 1, 0], [], []>} : vector<8x8xf32>, vector<8x8xf32>, vector<8x8xf32> -> vector<8x8xf32>
    %cst_26 = arith.constant 0.353553385 : f32
    %50 = vector.broadcast %cst_26 : f32 to vector<8x8xf32>
    %51 = arith.mulf %49, %50 : vector<8x8xf32>
    %cst_27 = arith.constant 0xFF800000 : f32
    %52 = vector.broadcast %cst_27 : f32 to vector<8x8xf32>
    %53 = arith.select %45, %51, %52 : vector<8x8xi1>, vector<8x8xf32>
    %cst_28 = arith.constant dense<0xFF800000> : vector<8xf32>
    %54 = vector.multi_reduction <maximumf>, %53, %cst_28 [1] : vector<8x8xf32> to vector<8xf32>
    %55 = vector.shape_cast %54 : vector<8xf32> to vector<8x1xf32>
    %56 = vector.broadcast %55 : vector<8x1xf32> to vector<8x8xf32>
    %57 = arith.subf %53, %56 : vector<8x8xf32>
    %58 = math.exp %57 : vector<8x8xf32>
    %cst_29 = arith.constant dense<0.000000e+00> : vector<8xf32>
    %59 = vector.multi_reduction <add>, %58, %cst_29 [1] : vector<8x8xf32> to vector<8xf32>
    %60 = vector.shape_cast %59 : vector<8xf32> to vector<8x1xf32>
    %61 = tpu.reciprocal %60 : vector<8x1xf32> -> vector<8x1xf32>
    %62 = vector.broadcast %61 : vector<8x1xf32> to vector<8x8xf32>
    %63 = arith.mulf %58, %62 : vector<8x8xf32>
    %cst_30 = arith.constant dense<0.000000e+00> : vector<8x8xf32>
    %64 = tpu.matmul %63, %48, %cst_30 {dimension_numbers = #tpu.dot_dimension_numbers<[1], [0], [0], [1], [0, 0, 1, 1], [], []>} : vector<8x8xf32>, vector<8x8xf32>, vector<8x8xf32> -> vector<8x8xf32>
    %c0_31 = arith.constant 0 : index
    %c0_32 = arith.constant 0 : index
    %65 = vector.load %arg25[%c0_31, %c0_32] : memref<8x32xf32, #tpu.memory_space<vmem>>, vector<8x8xf32>
    tpu.vector_store %arg25[%c0_31, %c0_32], %64 {strides = array<i32>} : memref<8x32xf32, #tpu.memory_space<vmem>>, vector<8x8xf32>,
    %66 = vector.extract_strided_slice %40 {offsets = [0, 8], sizes = [8, 8], strides = [1, 1]} : vector<8x32xf32> to vector<8x8xf32>
    %c0_33 = arith.constant 0 : index
    %c0_34 = arith.constant 0 : index
    %67 = vector.load %arg23[%c0_33, %c0_34] : memref<8x16xf32, #tpu.memory_space<vmem>>, vector<8x8xf32>
    %c0_35 = arith.constant 0 : index
    %c0_36 = arith.constant 0 : index
    %68 = vector.load %arg24[%c0_35, %c0_36] : memref<8x16xf32, #tpu.memory_space<vmem>>, vector<8x8xf32>
    %cst_37 = arith.constant dense<0.000000e+00> : vector<8x8xf32>
    %69 = tpu.matmul %66, %67, %cst_37 {dimension_numbers = #tpu.dot_dimension_numbers<[1], [1], [0], [0], [0, 0, 1, 0], [], []>} : vector<8x8xf32>, vector<8x8xf32>, vector<8x8xf32> -> vector<8x8xf32>
    %cst_38 = arith.constant 0.353553385 : f32
    %70 = vector.broadcast %cst_38 : f32 to vector<8x8xf32>
    %71 = arith.mulf %69, %70 : vector<8x8xf32>
    %cst_39 = arith.constant 0xFF800000 : f32
    %72 = vector.broadcast %cst_39 : f32 to vector<8x8xf32>
    %73 = arith.select %45, %71, %72 : vector<8x8xi1>, vector<8x8xf32>
    %cst_40 = arith.constant dense<0xFF800000> : vector<8xf32>
    %74 = vector.multi_reduction <maximumf>, %73, %cst_40 [1] : vector<8x8xf32> to vector<8xf32>
    %75 = vector.shape_cast %74 : vector<8xf32> to vector<8x1xf32>
    %76 = vector.broadcast %75 : vector<8x1xf32> to vector<8x8xf32>
    %77 = arith.subf %73, %76 : vector<8x8xf32>
    %78 = math.exp %77 : vector<8x8xf32>
    %cst_41 = arith.constant dense<0.000000e+00> : vector<8xf32>
    %79 = vector.multi_reduction <add>, %78, %cst_41 [1] : vector<8x8xf32> to vector<8xf32>
    %80 = vector.shape_cast %79 : vector<8xf32> to vector<8x1xf32>
    %81 = tpu.reciprocal %80 : vector<8x1xf32> -> vector<8x1xf32>
    %82 = vector.broadcast %81 : vector<8x1xf32> to vector<8x8xf32>
    %83 = arith.mulf %78, %82 : vector<8x8xf32>
    %cst_42 = arith.constant dense<0.000000e+00> : vector<8x8xf32>
    %84 = tpu.matmul %83, %68, %cst_42 {dimension_numbers = #tpu.dot_dimension_numbers<[1], [0], [0], [1], [0, 0, 1, 1], [], []>} : vector<8x8xf32>, vector<8x8xf32>, vector<8x8xf32> -> vector<8x8xf32>
    %c0_43 = arith.constant 0 : index
    %c8 = arith.constant 8 : index
    %85 = vector.load %arg25[%c0_43, %c8] : memref<8x32xf32, #tpu.memory_space<vmem>>, vector<8x8xf32>
    tpu.vector_store %arg25[%c0_43, %c8], %84 {strides = array<i32>} : memref<8x32xf32, #tpu.memory_space<vmem>>, vector<8x8xf32>,
    %86 = vector.extract_strided_slice %40 {offsets = [0, 16], sizes = [8, 8], strides = [1, 1]} : vector<8x32xf32> to vector<8x8xf32>
    %c0_44 = arith.constant 0 : index
    %c8_45 = arith.constant 8 : index
    %87 = vector.load %arg23[%c0_44, %c8_45] : memref<8x16xf32, #tpu.memory_space<vmem>>, vector<8x8xf32>
    %c0_46 = arith.constant 0 : index
    %c8_47 = arith.constant 8 : index
    %88 = vector.load %arg24[%c0_46, %c8_47] : memref<8x16xf32, #tpu.memory_space<vmem>>, vector<8x8xf32>
    %cst_48 = arith.constant dense<0.000000e+00> : vector<8x8xf32>
    %89 = tpu.matmul %86, %87, %cst_48 {dimension_numbers = #tpu.dot_dimension_numbers<[1], [1], [0], [0], [0, 0, 1, 0], [], []>} : vector<8x8xf32>, vector<8x8xf32>, vector<8x8xf32> -> vector<8x8xf32>
    %cst_49 = arith.constant 0.353553385 : f32
    %90 = vector.broadcast %cst_49 : f32 to vector<8x8xf32>
    %91 = arith.mulf %89, %90 : vector<8x8xf32>
    %cst_50 = arith.constant 0xFF800000 : f32
    %92 = vector.broadcast %cst_50 : f32 to vector<8x8xf32>
    %93 = arith.select %45, %91, %92 : vector<8x8xi1>, vector<8x8xf32>
    %cst_51 = arith.constant dense<0xFF800000> : vector<8xf32>
    %94 = vector.multi_reduction <maximumf>, %93, %cst_51 [1] : vector<8x8xf32> to vector<8xf32>
    %95 = vector.shape_cast %94 : vector<8xf32> to vector<8x1xf32>
    %96 = vector.broadcast %95 : vector<8x1xf32> to vector<8x8xf32>
    %97 = arith.subf %93, %96 : vector<8x8xf32>
    %98 = math.exp %97 : vector<8x8xf32>
    %cst_52 = arith.constant dense<0.000000e+00> : vector<8xf32>
    %99 = vector.multi_reduction <add>, %98, %cst_52 [1] : vector<8x8xf32> to vector<8xf32>
    %100 = vector.shape_cast %99 : vector<8xf32> to vector<8x1xf32>
    %101 = tpu.reciprocal %100 : vector<8x1xf32> -> vector<8x1xf32>
    %102 = vector.broadcast %101 : vector<8x1xf32> to vector<8x8xf32>
    %103 = arith.mulf %98, %102 : vector<8x8xf32>
    %cst_53 = arith.constant dense<0.000000e+00> : vector<8x8xf32>
    %104 = tpu.matmul %103, %88, %cst_53 {dimension_numbers = #tpu.dot_dimension_numbers<[1], [0], [0], [1], [0, 0, 1, 1], [], []>} : vector<8x8xf32>, vector<8x8xf32>, vector<8x8xf32> -> vector<8x8xf32>
    %c0_54 = arith.constant 0 : index
    %c16 = arith.constant 16 : index
    %105 = vector.load %arg25[%c0_54, %c16] : memref<8x32xf32, #tpu.memory_space<vmem>>, vector<8x8xf32>
    tpu.vector_store %arg25[%c0_54, %c16], %104 {strides = array<i32>} : memref<8x32xf32, #tpu.memory_space<vmem>>, vector<8x8xf32>,
    %106 = vector.extract_strided_slice %40 {offsets = [0, 24], sizes = [8, 8], strides = [1, 1]} : vector<8x32xf32> to vector<8x8xf32>
    %c0_55 = arith.constant 0 : index
    %c8_56 = arith.constant 8 : index
    %107 = vector.load %arg23[%c0_55, %c8_56] : memref<8x16xf32, #tpu.memory_space<vmem>>, vector<8x8xf32>
    %c0_57 = arith.constant 0 : index
    %c8_58 = arith.constant 8 : index
    %108 = vector.load %arg24[%c0_57, %c8_58] : memref<8x16xf32, #tpu.memory_space<vmem>>, vector<8x8xf32>
    %cst_59 = arith.constant dense<0.000000e+00> : vector<8x8xf32>
    %109 = tpu.matmul %106, %107, %cst_59 {dimension_numbers = #tpu.dot_dimension_numbers<[1], [1], [0], [0], [0, 0, 1, 0], [], []>} : vector<8x8xf32>, vector<8x8xf32>, vector<8x8xf32> -> vector<8x8xf32>
    %cst_60 = arith.constant 0.353553385 : f32
    %110 = vector.broadcast %cst_60 : f32 to vector<8x8xf32>
    %111 = arith.mulf %109, %110 : vector<8x8xf32>
    %cst_61 = arith.constant 0xFF800000 : f32
    %112 = vector.broadcast %cst_61 : f32 to vector<8x8xf32>
    %113 = arith.select %45, %111, %112 : vector<8x8xi1>, vector<8x8xf32>
    %cst_62 = arith.constant dense<0xFF800000> : vector<8xf32>
    %114 = vector.multi_reduction <maximumf>, %113, %cst_62 [1] : vector<8x8xf32> to vector<8xf32>
    %115 = vector.shape_cast %114 : vector<8xf32> to vector<8x1xf32>
    %116 = vector.broadcast %115 : vector<8x1xf32> to vector<8x8xf32>
    %117 = arith.subf %113, %116 : vector<8x8xf32>
    %118 = math.exp %117 : vector<8x8xf32>
    %cst_63 = arith.constant dense<0.000000e+00> : vector<8xf32>
    %119 = vector.multi_reduction <add>, %118, %cst_63 [1] : vector<8x8xf32> to vector<8xf32>
    %120 = vector.shape_cast %119 : vector<8xf32> to vector<8x1xf32>
    %121 = tpu.reciprocal %120 : vector<8x1xf32> -> vector<8x1xf32>
    %122 = vector.broadcast %121 : vector<8x1xf32> to vector<8x8xf32>
    %123 = arith.mulf %118, %122 : vector<8x8xf32>
    %cst_64 = arith.constant dense<0.000000e+00> : vector<8x8xf32>
    %124 = tpu.matmul %123, %108, %cst_64 {dimension_numbers = #tpu.dot_dimension_numbers<[1], [0], [0], [1], [0, 0, 1, 1], [], []>} : vector<8x8xf32>, vector<8x8xf32>, vector<8x8xf32> -> vector<8x8xf32>
    %c0_65 = arith.constant 0 : index
    %c24 = arith.constant 24 : index
    %125 = vector.load %arg25[%c0_65, %c24] : memref<8x32xf32, #tpu.memory_space<vmem>>, vector<8x8xf32>
    tpu.vector_store %arg25[%c0_65, %c24], %124 {strides = array<i32>} : memref<8x32xf32, #tpu.memory_space<vmem>>, vector<8x8xf32>,
    %c0_66 = arith.constant 0 : index
    %c0_67 = arith.constant 0 : index
    %126 = vector.load %arg25[%c0_66, %c0_67] : memref<8x32xf32, #tpu.memory_space<vmem>>, vector<8x32xf32>
    %c0_68 = arith.constant 0 : index
    %c0_69 = arith.constant 0 : index
    %127 = vector.load %arg13[%c0_68, %c0_69] : memref<32x32xf32, #tpu.memory_space<vmem>>, vector<32x32xf32>
    %cst_70 = arith.constant dense<0.000000e+00> : vector<8x32xf32>
    %128 = tpu.matmul %126, %127, %cst_70 {dimension_numbers = #tpu.dot_dimension_numbers<[1], [0], [0], [1], [0, 0, 1, 1], [], []>} : vector<8x32xf32>, vector<32x32xf32>, vector<8x32xf32> -> vector<8x32xf32>
    %129 = arith.addf %1, %128 : vector<8x32xf32>
    %c0_71 = arith.constant 0 : index
    %c0_72 = arith.constant 0 : index
    %130 = vector.load %arg20[%c0_71, %c0_72] : memref<1x32xf32, #tpu.memory_space<vmem>>, vector<1x32xf32>
    %c0_73 = arith.constant 0 : index
    %c0_74 = arith.constant 0 : index
    %131 = vector.load %arg21[%c0_73, %c0_74] : memref<1x32xf32, #tpu.memory_space<vmem>>, vector<1x32xf32>
    %cst_75 = arith.constant dense<0.000000e+00> : vector<8xf32>
    %132 = vector.multi_reduction <add>, %129, %cst_75 [1] : vector<8x32xf32> to vector<8xf32>
    %133 = vector.shape_cast %132 : vector<8xf32> to vector<8x1xf32>
    %cst_76 = arith.constant 3.200000e+01 : f32
    %134 = vector.broadcast %cst_76 : f32 to vector<8x1xf32>
    %135 = arith.divf %133, %134 : vector<8x1xf32>
    %136 = vector.broadcast %135 : vector<8x1xf32> to vector<8x32xf32>
    %137 = arith.subf %129, %136 : vector<8x32xf32>
    %138 = arith.mulf %137, %137 : vector<8x32xf32>
    %cst_77 = arith.constant dense<0.000000e+00> : vector<8xf32>
    %139 = vector.multi_reduction <add>, %138, %cst_77 [1] : vector<8x32xf32> to vector<8xf32>
    %140 = vector.shape_cast %139 : vector<8xf32> to vector<8x1xf32>
    %cst_78 = arith.constant 3.200000e+01 : f32
    %141 = vector.broadcast %cst_78 : f32 to vector<8x1xf32>
    %142 = arith.divf %140, %141 : vector<8x1xf32>
    %143 = vector.broadcast %135 : vector<8x1xf32> to vector<8x32xf32>
    %144 = arith.subf %129, %143 : vector<8x32xf32>
    %cst_79 = arith.constant 9.99999974E-6 : f32
    %145 = vector.broadcast %cst_79 : f32 to vector<8x1xf32>
    %146 = arith.addf %142, %145 : vector<8x1xf32>
    %147 = math.rsqrt %146 : vector<8x1xf32>
    %148 = vector.broadcast %147 : vector<8x1xf32> to vector<8x32xf32>
    %149 = arith.mulf %144, %148 : vector<8x32xf32>
    %150 = vector.broadcast %130 : vector<1x32xf32> to vector<8x32xf32>
    %151 = arith.mulf %149, %150 : vector<8x32xf32>
    %152 = vector.broadcast %131 : vector<1x32xf32> to vector<8x32xf32>
    %153 = arith.addf %151, %152 : vector<8x32xf32>
    %cst_80 = arith.constant 0.000000e+00 : f32
    %154 = vector.broadcast %cst_80 : f32 to vector<8x32xf32>
    %c0_81 = arith.constant 0 : index
    %c0_82 = arith.constant 0 : index
    %155 = vector.load %arg14[%c0_81, %c0_82] : memref<32x128xf32, #tpu.memory_space<vmem>>, vector<32x128xf32>
    %cst_83 = arith.constant dense<0.000000e+00> : vector<8x128xf32>
    %156 = tpu.matmul %153, %155, %cst_83 {dimension_numbers = #tpu.dot_dimension_numbers<[1], [0], [0], [1], [0, 0, 1, 1], [], []>} : vector<8x32xf32>, vector<32x128xf32>, vector<8x128xf32> -> vector<8x128xf32>
    %c0_84 = arith.constant 0 : index
    %c0_85 = arith.constant 0 : index
    %157 = vector.load %arg15[%c0_84, %c0_85] : memref<1x128xf32, #tpu.memory_space<vmem>>, vector<1x128xf32>
    %158 = vector.broadcast %157 : vector<1x128xf32> to vector<8x128xf32>
    %159 = arith.addf %156, %158 : vector<8x128xf32>
    %cst_86 = arith.constant 5.000000e-01 : f32
    %160 = vector.broadcast %cst_86 : f32 to vector<8x128xf32>
    %161 = arith.mulf %160, %159 : vector<8x128xf32>
    %cst_87 = arith.constant 0.707106769 : f32
    %162 = vector.broadcast %cst_87 : f32 to vector<8x128xf32>
    %163 = arith.mulf %159, %162 : vector<8x128xf32>
    %164 = math.erf %163 : vector<8x128xf32>
    %cst_88 = arith.constant 1.000000e+00 : f32
    %165 = vector.broadcast %cst_88 : f32 to vector<8x128xf32>
    %166 = arith.addf %165, %164 : vector<8x128xf32>
    %167 = arith.mulf %161, %166 : vector<8x128xf32>
    %c0_89 = arith.constant 0 : index
    %c0_90 = arith.constant 0 : index
    %168 = vector.load %arg16[%c0_89, %c0_90] : memref<128x32xf32, #tpu.memory_space<vmem>>, vector<128x32xf32>
    %cst_91 = arith.constant dense<0.000000e+00> : vector<8x32xf32>
    %169 = tpu.matmul %167, %168, %cst_91 {dimension_numbers = #tpu.dot_dimension_numbers<[1], [0], [0], [1], [0, 0, 1, 1], [], []>} : vector<8x128xf32>, vector<128x32xf32>, vector<8x32xf32> -> vector<8x32xf32>
    %170 = arith.addf %154, %169 : vector<8x32xf32>
    %c0_92 = arith.constant 0 : index
    %c0_93 = arith.constant 0 : index
    %171 = vector.load %arg17[%c0_92, %c0_93] : memref<1x32xf32, #tpu.memory_space<vmem>>, vector<1x32xf32>
    %172 = vector.broadcast %171 : vector<1x32xf32> to vector<8x32xf32>
    %173 = arith.addf %170, %172 : vector<8x32xf32>
    %174 = arith.addf %129, %173 : vector<8x32xf32>
    %c0_94 = arith.constant 0 : index
    %c0_95 = arith.constant 0 : index
    %c0_96 = arith.constant 0 : index
    %175 = vector.load %arg22[%c0_94, %c0_95, %c0_96] : memref<1x8x32xf32, #tpu.memory_space<vmem>>, vector<1x8x32xf32>
    %176 = vector.shape_cast %175 : vector<1x8x32xf32> to vector<8x32xf32>
    %177 = vector.shape_cast %174 : vector<8x32xf32> to vector<1x8x32xf32>
    tpu.vector_store %arg22[%c0_94, %c0_95, %c0_96], %177 {strides = array<i32>} : memref<1x8x32xf32, #tpu.memory_space<vmem>>, vector<1x8x32xf32>,
    return
  }
  func.func @transform_0(%arg0: i32, %arg1: i32) -> (i32, i32, i32) {
    %c0_i32 = arith.constant 0 : i32
    %c0_i32_0 = arith.constant 0 : i32
    return %arg0, %arg1, %c0_i32 : i32, i32, i32
  }
  func.func @transform_1(%arg0: i32, %arg1: i32) -> (i32, i32, i32) {
    %c0_i32 = arith.constant 0 : i32
    %c0_i32_0 = arith.constant 0 : i32
    %c0_i32_1 = arith.constant 0 : i32
    return %arg0, %c0_i32, %c0_i32_0 : i32, i32, i32
  }
  func.func @transform_2(%arg0: i32, %arg1: i32) -> (i32, i32) {
    %c0_i32 = arith.constant 0 : i32
    %c0_i32_0 = arith.constant 0 : i32
    return %arg1, %c0_i32 : i32, i32
  }
  func.func @transform_3(%arg0: i32, %arg1: i32) -> (i32, i32) {
    %c0_i32 = arith.constant 0 : i32
    %c0_i32_0 = arith.constant 0 : i32
    return %arg1, %c0_i32 : i32, i32
  }
  func.func @transform_4(%arg0: i32, %arg1: i32) -> (i32, i32) {
    %c0_i32 = arith.constant 0 : i32
    %c0_i32_0 = arith.constant 0 : i32
    %c0_i32_1 = arith.constant 0 : i32
    return %c0_i32, %c0_i32_0 : i32, i32
  }
  func.func @transform_5(%arg0: i32, %arg1: i32) -> (i32, i32) {
    %c0_i32 = arith.constant 0 : i32
    %c0_i32_0 = arith.constant 0 : i32
    %c0_i32_1 = arith.constant 0 : i32
    return %c0_i32, %c0_i32_0 : i32, i32
  }
  func.func @transform_6(%arg0: i32, %arg1: i32) -> (i32, i32) {
    %c0_i32 = arith.constant 0 : i32
    %c0_i32_0 = arith.constant 0 : i32
    %c0_i32_1 = arith.constant 0 : i32
    return %c0_i32, %c0_i32_0 : i32, i32
  }
  func.func @transform_7(%arg0: i32, %arg1: i32) -> (i32, i32) {
    %c0_i32 = arith.constant 0 : i32
    %c0_i32_0 = arith.constant 0 : i32
    %c0_i32_1 = arith.constant 0 : i32
    return %c0_i32, %c0_i32_0 : i32, i32
  }
  func.func @transform_8(%arg0: i32, %arg1: i32) -> (i32, i32) {
    %c0_i32 = arith.constant 0 : i32
    %c0_i32_0 = arith.constant 0 : i32
    %c0_i32_1 = arith.constant 0 : i32
    return %c0_i32, %c0_i32_0 : i32, i32
  }
  func.func @transform_9(%arg0: i32, %arg1: i32) -> (i32, i32) {
    %c0_i32 = arith.constant 0 : i32
    %c0_i32_0 = arith.constant 0 : i32
    %c0_i32_1 = arith.constant 0 : i32
    return %c0_i32, %c0_i32_0 : i32, i32
  }
  func.func @transform_10(%arg0: i32, %arg1: i32) -> (i32, i32) {
    %c0_i32 = arith.constant 0 : i32
    %c0_i32_0 = arith.constant 0 : i32
    %c0_i32_1 = arith.constant 0 : i32
    return %c0_i32, %c0_i32_0 : i32, i32
  }
  func.func @transform_11(%arg0: i32, %arg1: i32) -> (i32, i32) {
    %c0_i32 = arith.constant 0 : i32
    %c0_i32_0 = arith.constant 0 : i32
    %c0_i32_1 = arith.constant 0 : i32
    return %c0_i32, %c0_i32_0 : i32, i32
  }
  func.func @transform_12(%arg0: i32, %arg1: i32) -> (i32, i32) {
    %c0_i32 = arith.constant 0 : i32
    %c0_i32_0 = arith.constant 0 : i32
    %c0_i32_1 = arith.constant 0 : i32
    return %c0_i32, %c0_i32_0 : i32, i32
  }
  func.func @transform_13(%arg0: i32, %arg1: i32) -> (i32, i32) {
    %c0_i32 = arith.constant 0 : i32
    %c0_i32_0 = arith.constant 0 : i32
    %c0_i32_1 = arith.constant 0 : i32
    return %c0_i32, %c0_i32_0 : i32, i32
  }
  func.func @transform_14(%arg0: i32, %arg1: i32) -> (i32, i32) {
    %c0_i32 = arith.constant 0 : i32
    %c0_i32_0 = arith.constant 0 : i32
    %c0_i32_1 = arith.constant 0 : i32
    return %c0_i32, %c0_i32_0 : i32, i32
  }
  func.func @transform_15(%arg0: i32, %arg1: i32) -> (i32, i32) {
    %c0_i32 = arith.constant 0 : i32
    %c0_i32_0 = arith.constant 0 : i32
    %c0_i32_1 = arith.constant 0 : i32
    return %c0_i32, %c0_i32_0 : i32, i32
  }
  func.func @transform_16(%arg0: i32, %arg1: i32) -> (i32, i32) {
    %c0_i32 = arith.constant 0 : i32
    %c0_i32_0 = arith.constant 0 : i32
    %c0_i32_1 = arith.constant 0 : i32
    return %c0_i32, %c0_i32_0 : i32, i32
  }
  func.func @transform_17(%arg0: i32, %arg1: i32) -> (i32, i32) {
    %c0_i32 = arith.constant 0 : i32
    %c0_i32_0 = arith.constant 0 : i32
    %c0_i32_1 = arith.constant 0 : i32
    return %c0_i32, %c0_i32_0 : i32, i32
  }
  func.func @transform_18(%arg0: i32, %arg1: i32) -> (i32, i32) {
    %c0_i32 = arith.constant 0 : i32
    %c0_i32_0 = arith.constant 0 : i32
    %c0_i32_1 = arith.constant 0 : i32
    return %c0_i32, %c0_i32_0 : i32, i32
  }
  func.func @transform_19(%arg0: i32, %arg1: i32) -> (i32, i32) {
    %c0_i32 = arith.constant 0 : i32
    %c0_i32_0 = arith.constant 0 : i32
    %c0_i32_1 = arith.constant 0 : i32
    return %c0_i32, %c0_i32_0 : i32, i32
  }
  func.func @transform_20(%arg0: i32, %arg1: i32) -> (i32, i32, i32) {
    %c0_i32 = arith.constant 0 : i32
    %c0_i32_0 = arith.constant 0 : i32
    return %arg0, %arg1, %c0_i32 : i32, i32, i32
  }
}

</mosaic_0001>

<llo_original>
// kernel: tpu_custom_call.1
$region0: #{tpu_custom_call.1}
  #allocation0 [shape = 'u32[]', space=smem, size = 0x4, offset = 0x4, fixed_abs, tag = 'smem constant byte address 0x4 - core index']
  #allocation1 [shape = 'u32[144,128]{1,0:T(1,128)}', space=vmem, size = 0x12000, scoped, tag = 'internal scratch']
  #allocation2 [shape = 'f32[8,16]{1,0:T(8,128)}', space=vmem, size = 0x1000, scoped, tag = 'scratch operand']
  #allocation3 [shape = 'f32[8,16]{1,0:T(8,128)}', space=vmem, size = 0x1000, scoped, tag = 'scratch operand']
  #allocation4 [shape = 'f32[8,32]{1,0:T(8,128)}', space=vmem, size = 0x1000, scoped, tag = 'scratch operand']
  %s0 = inlined_call_operand.vmem [shape: f32[2,8,32], index: 0, kind: input, shape index: {}]
  %s1 = inlined_call_operand.vmem [shape: f32[2,8,32], index: 1, kind: input, shape index: {}]
  %s2 = inlined_call_operand.vmem [shape: f32[8,8], index: 2, kind: input, shape index: {}]
  %s3 = inlined_call_operand.vmem [shape: f32[8,8], index: 3, kind: input, shape index: {}]
  %s4 = inlined_call_operand.vmem [shape: f32[8,8], index: 4, kind: input, shape index: {}]
  %s5 = inlined_call_operand.vmem [shape: f32[8,8], index: 5, kind: input, shape index: {}]
  %s6 = inlined_call_operand.vmem [shape: f32[32,32], index: 6, kind: input, shape index: {}]
  %s7 = inlined_call_operand.vmem [shape: f32[32,32], index: 7, kind: input, shape index: {}]
  %s8 = inlined_call_operand.vmem [shape: f32[32,16], index: 8, kind: input, shape index: {}]
  %s9 = inlined_call_operand.vmem [shape: f32[32,16], index: 9, kind: input, shape index: {}]
  %s10 = inlined_call_operand.vmem [shape: f32[32,16], index: 10, kind: input, shape index: {}]
  %s11 = inlined_call_operand.vmem [shape: f32[32,32], index: 11, kind: input, shape index: {}]
  %s12 = inlined_call_operand.vmem [shape: f32[32,128], index: 12, kind: input, shape index: {}]
  %s13 = inlined_call_operand.vmem [shape: f32[1,128], index: 13, kind: input, shape index: {}]
  %s14 = inlined_call_operand.vmem [shape: f32[128,32], index: 14, kind: input, shape index: {}]
  %s15 = inlined_call_operand.vmem [shape: f32[1,32], index: 15, kind: input, shape index: {}]
  %s16 = inlined_call_operand.vmem [shape: f32[1,32], index: 16, kind: input, shape index: {}]
  %s17 = inlined_call_operand.vmem [shape: f32[1,32], index: 17, kind: input, shape index: {}]
  %s18 = inlined_call_operand.vmem [shape: f32[1,32], index: 18, kind: input, shape index: {}]
  %s19 = inlined_call_operand.vmem [shape: f32[1,32], index: 19, kind: input, shape index: {}]
  %s20 = inlined_call_operand.hbm [shape: f32[2,8,32], index: 20, kind: output, shape index: {}]
  %s21 = sld [smem:[#allocation0]]
  $region117: #{tpu_custom_call.1} parent=0
    _
  %s23 = ssub.s32 1, %s21
  %s24 = scalar_select 0, %s23, %s21
  $region1: #{tpu_custom_call.1} parent=0
    #allocation5 [shape = 'u8[8192]{0}', space=vmem, size = 0x2000, scoped, tag = 'output window, operand 0']
    #allocation6 [shape = 's32[2]{0}', space=sflag, size = 0x8, scoped, tag = 'scoped memory for tpu_custom_call.1']
    %25 = vsyncpa [#allocation6], 0
    %s26 = scalar_lea.sflag [#allocation6], 1
    %27 = vsyncpa %s26, 0
    loop: start=0, step=1, limit=4
    $region2: #{tpu_custom_call.1} parent=1 // loop_pre_header
      _
    $region3: #{tpu_custom_call.1} parent=1 // loop_header
      %s29 = sphi 0, %s33
      %p30 = scmp.ge.s32.totalorder %s29, 4
      %s36 = sphi 0, %s48
      %s37 = sphi 0, %s44
      %s38 = sphi 0, %s36
      %s39 = sphi 0, %s37
      %s40 = sphi 0, %s38
      %s41 = sphi 0, %s39
      %s53 = sphi 0, %s55
      %s56 = sphi 0, %s53
      %s57 = sphi 0, %s56
      %s73 = sphi 0, %s57
      %s79 = sphi 0, %s81
      %s82 = sphi 0, %s79
      %s83 = sphi 0, %s82
      %s99 = sphi 0, %s83
      %s105 = sphi 0, %s107
      %s108 = sphi 0, %s105
      %s109 = sphi 0, %s108
      %s125 = sphi 0, %s109
      %s131 = sphi 0, %s133
      %s134 = sphi 0, %s131
      %s135 = sphi 0, %s134
      %s151 = sphi 0, %s135
      %s155 = sphi 0, %s155
      %s157 = sphi 0, %s155
      %s158 = sphi 0, %s157
      %s172 = sphi 0, %s158
      %s176 = sphi 0, %s176
      %s178 = sphi 0, %s176
      %s179 = sphi 0, %s178
      %s193 = sphi 0, %s179
      %s197 = sphi 0, %s197
      %s199 = sphi 0, %s197
      %s200 = sphi 0, %s199
      %s214 = sphi 0, %s200
      %s218 = sphi 0, %s218
      %s220 = sphi 0, %s218
      %s221 = sphi 0, %s220
      %s235 = sphi 0, %s221
      %s239 = sphi 0, %s239
      %s241 = sphi 0, %s239
      %s242 = sphi 0, %s241
      %s256 = sphi 0, %s242
      %s260 = sphi 0, %s260
      %s262 = sphi 0, %s260
      %s263 = sphi 0, %s262
      %s277 = sphi 0, %s263
      %s281 = sphi 0, %s281
      %s283 = sphi 0, %s281
      %s284 = sphi 0, %s283
      %s298 = sphi 0, %s284
      %s302 = sphi 0, %s302
      %s304 = sphi 0, %s302
      %s305 = sphi 0, %s304
      %s319 = sphi 0, %s305
      %s323 = sphi 0, %s323
      %s325 = sphi 0, %s323
      %s326 = sphi 0, %s325
      %s340 = sphi 0, %s326
      %s344 = sphi 0, %s344
      %s346 = sphi 0, %s344
      %s347 = sphi 0, %s346
      %s361 = sphi 0, %s347
      %s365 = sphi 0, %s365
      %s367 = sphi 0, %s365
      %s368 = sphi 0, %s367
      %s382 = sphi 0, %s368
      %s386 = sphi 0, %s386
      %s388 = sphi 0, %s386
      %s389 = sphi 0, %s388
      %s403 = sphi 0, %s389
      %s407 = sphi 0, %s407
      %s409 = sphi 0, %s407
      %s410 = sphi 0, %s409
      %s424 = sphi 0, %s410
      %s428 = sphi 0, %s428
      %s430 = sphi 0, %s428
      %s431 = sphi 0, %s430
      %s445 = sphi 0, %s431
      %s449 = sphi 0, %s449
      %s451 = sphi 0, %s449
      %s452 = sphi 0, %s451
      %s466 = sphi 0, %s452
      %s470 = sphi 0, %s470
      %s472 = sphi 0, %s470
      %s473 = sphi 0, %s472
      %s487 = sphi 0, %s473
      %s495 = sphi 0, %s497
      %s498 = sphi 0, %s495
      %s499 = sphi 0, %s498
      %s515 = sphi 0, %s499
    $region4: #{tpu_custom_call.1} parent=1 // loop_header_branch
      %32 = sbr.rel (%p30) target = $region8
    $region5: #{tpu_custom_call.1} parent=1 // loop_body
      %s34 = ssub.s32 %s29, 1
      %s35 = ssub.s32 %s29, 2
      %s42 = sadd.s32 1, %s37
      %p43 = scmp.ge.s32.totalorder %s42, 1
      %s44 = scalar_select %p43, 0, %s42
      %s45 = sadd.s32 1, %s36
      %s46 = scalar_select %p43, %s45, %s36
      %p47 = scmp.ge.s32.totalorder %s46, 2
      %s48 = scalar_select %p47, 0, %s46
      %s49 = ssub.s32 %s36, %s48
      %s50 = ssub.s32 %s37, %s44
      %s51 = sor.u32 %s49, %s50
      %p52 = scmp.eq.s32.totalorder %s51, 0
      %s54 = sadd.s32 %s53, 1
      %s55 = scalar_select %p52, %s53, %s54
      %p58 = pneg %p52
      %p59 = scmp.eq.s32.totalorder %s29, 1
      %p60 = por %p58, %p59
      %p61 = scmp.ne.s32.totalorder %s53, %s56
      %p62 = scmp.eq.s32.totalorder %s29, 0
      %p63 = por %p61, %p62
      %p64 = scmp.ne.s32.totalorder %s53, %s56
      %p65 = scmp.eq.s32.totalorder %s34, 1
      %p66 = por %p64, %p65
      %p67 = scmp.ne.s32.totalorder %s56, %s57
      %p68 = scmp.eq.s32.totalorder %s34, 0
      %p69 = por %p67, %p68
      %p70 = scmp.ne.s32.totalorder %s56, %s57
      %p71 = scmp.eq.s32.totalorder %s35, 1
      %p72 = por %p70, %p71
      %p74 = scmp.ne.s32.totalorder %s57, %s73
      %p75 = scmp.eq.s32.totalorder %s35, 0
      %p76 = por %p74, %p75
      %s77 = ssub.s32 %s36, %s48
      %p78 = scmp.eq.s32.totalorder %s77, 0
      %s80 = sadd.s32 %s79, 1
      %s81 = scalar_select %p78, %s79, %s80
      %p84 = pneg %p78
      %p85 = scmp.eq.s32.totalorder %s29, 1
      %p86 = por %p84, %p85
      %p87 = scmp.ne.s32.totalorder %s79, %s82
      %p88 = scmp.eq.s32.totalorder %s29, 0
      %p89 = por %p87, %p88
      %p90 = scmp.ne.s32.totalorder %s79, %s82
      %p91 = scmp.eq.s32.totalorder %s34, 1
      %p92 = por %p90, %p91
      %p93 = scmp.ne.s32.totalorder %s82, %s83
      %p94 = scmp.eq.s32.totalorder %s34, 0
      %p95 = por %p93, %p94
      %p96 = scmp.ne.s32.totalorder %s82, %s83
      %p97 = scmp.eq.s32.totalorder %s35, 1
      %p98 = por %p96, %p97
      %p100 = scmp.ne.s32.totalorder %s83, %s99
      %p101 = scmp.eq.s32.totalorder %s35, 0
      %p102 = por %p100, %p101
      %s103 = ssub.s32 %s37, %s44
      %p104 = scmp.eq.s32.totalorder %s103, 0
      %s106 = sadd.s32 %s105, 1
      %s107 = scalar_select %p104, %s105, %s106
      %p110 = pneg %p104
      %p111 = scmp.eq.s32.totalorder %s29, 1
      %p112 = por %p110, %p111
      %p113 = scmp.ne.s32.totalorder %s105, %s108
      %p114 = scmp.eq.s32.totalorder %s29, 0
      %p115 = por %p113, %p114
      %p116 = scmp.ne.s32.totalorder %s105, %s108
      %p117 = scmp.eq.s32.totalorder %s34, 1
      %p118 = por %p116, %p117
      %p119 = scmp.ne.s32.totalorder %s108, %s109
      %p120 = scmp.eq.s32.totalorder %s34, 0
      %p121 = por %p119, %p120
      %p122 = scmp.ne.s32.totalorder %s108, %s109
      %p123 = scmp.eq.s32.totalorder %s35, 1
      %p124 = por %p122, %p123
      %p126 = scmp.ne.s32.totalorder %s109, %s125
      %p127 = scmp.eq.s32.totalorder %s35, 0
      %p128 = por %p126, %p127
      %s129 = ssub.s32 %s37, %s44
      %p130 = scmp.eq.s32.totalorder %s129, 0
      %s132 = sadd.s32 %s131, 1
      %s133 = scalar_select %p130, %s131, %s132
      %p136 = pneg %p130
      %p137 = scmp.eq.s32.totalorder %s29, 1
      %p138 = por %p136, %p137
      %p139 = scmp.ne.s32.totalorder %s131, %s134
      %p140 = scmp.eq.s32.totalorder %s29, 0
      %p141 = por %p139, %p140
      %p142 = scmp.ne.s32.totalorder %s131, %s134
      %p143 = scmp.eq.s32.totalorder %s34, 1
      %p144 = por %p142, %p143
      %p145 = scmp.ne.s32.totalorder %s134, %s135
      %p146 = scmp.eq.s32.totalorder %s34, 0
      %p147 = por %p145, %p146
      %p148 = scmp.ne.s32.totalorder %s134, %s135
      %p149 = scmp.eq.s32.totalorder %s35, 1
      %p150 = por %p148, %p149
      %p152 = scmp.ne.s32.totalorder %s135, %s151
      %p153 = scmp.eq.s32.totalorder %s35, 0
      %p154 = por %p152, %p153
      %s156 = sadd.s32 %s155, 1
      %p159 = scmp.eq.s32.totalorder %s29, 1
      %p160 = scmp.ne.s32.totalorder %s155, %s157
      %p161 = scmp.eq.s32.totalorder %s29, 0
      %p162 = por %p160, %p161
      %p163 = scmp.ne.s32.totalorder %s155, %s157
      %p164 = scmp.eq.s32.totalorder %s34, 1
      %p165 = por %p163, %p164
      %p166 = scmp.ne.s32.totalorder %s157, %s158
      %p167 = scmp.eq.s32.totalorder %s34, 0
      %p168 = por %p166, %p167
      %p169 = scmp.ne.s32.totalorder %s157, %s158
      %p170 = scmp.eq.s32.totalorder %s35, 1
      %p171 = por %p169, %p170
      %p173 = scmp.ne.s32.totalorder %s158, %s172
      %p174 = scmp.eq.s32.totalorder %s35, 0
      %p175 = por %p173, %p174
      %s177 = sadd.s32 %s176, 1
      %p180 = scmp.eq.s32.totalorder %s29, 1
      %p181 = scmp.ne.s32.totalorder %s176, %s178
      %p182 = scmp.eq.s32.totalorder %s29, 0
      %p183 = por %p181, %p182
      %p184 = scmp.ne.s32.totalorder %s176, %s178
      %p185 = scmp.eq.s32.totalorder %s34, 1
      %p186 = por %p184, %p185
      %p187 = scmp.ne.s32.totalorder %s178, %s179
      %p188 = scmp.eq.s32.totalorder %s34, 0
      %p189 = por %p187, %p188
      %p190 = scmp.ne.s32.totalorder %s178, %s179
      %p191 = scmp.eq.s32.totalorder %s35, 1
      %p192 = por %p190, %p191
      %p194 = scmp.ne.s32.totalorder %s179, %s193
      %p195 = scmp.eq.s32.totalorder %s35, 0
      %p196 = por %p194, %p195
      %s198 = sadd.s32 %s197, 1
      %p201 = scmp.eq.s32.totalorder %s29, 1
      %p202 = scmp.ne.s32.totalorder %s197, %s199
      %p203 = scmp.eq.s32.totalorder %s29, 0
      %p204 = por %p202, %p203
      %p205 = scmp.ne.s32.totalorder %s197, %s199
      %p206 = scmp.eq.s32.totalorder %s34, 1
      %p207 = por %p205, %p206
      %p208 = scmp.ne.s32.totalorder %s199, %s200
      %p209 = scmp.eq.s32.totalorder %s34, 0
      %p210 = por %p208, %p209
      %p211 = scmp.ne.s32.totalorder %s199, %s200
      %p212 = scmp.eq.s32.totalorder %s35, 1
      %p213 = por %p211, %p212
      %p215 = scmp.ne.s32.totalorder %s200, %s214
      %p216 = scmp.eq.s32.totalorder %s35, 0
      %p217 = por %p215, %p216
      %s219 = sadd.s32 %s218, 1
      %p222 = scmp.eq.s32.totalorder %s29, 1
      %p223 = scmp.ne.s32.totalorder %s218, %s220
      %p224 = scmp.eq.s32.totalorder %s29, 0
      %p225 = por %p223, %p224
      %p226 = scmp.ne.s32.totalorder %s218, %s220
      %p227 = scmp.eq.s32.totalorder %s34, 1
      %p228 = por %p226, %p227
      %p229 = scmp.ne.s32.totalorder %s220, %s221
      %p230 = scmp.eq.s32.totalorder %s34, 0
      %p231 = por %p229, %p230
      %p232 = scmp.ne.s32.totalorder %s220, %s221
      %p233 = scmp.eq.s32.totalorder %s35, 1
      %p234 = por %p232, %p233
      %p236 = scmp.ne.s32.totalorder %s221, %s235
      %p237 = scmp.eq.s32.totalorder %s35, 0
      %p238 = por %p236, %p237
      %s240 = sadd.s32 %s239, 1
      %p243 = scmp.eq.s32.totalorder %s29, 1
      %p244 = scmp.ne.s32.totalorder %s239, %s241
      %p245 = scmp.eq.s32.totalorder %s29, 0
      %p246 = por %p244, %p245
      %p247 = scmp.ne.s32.totalorder %s239, %s241
      %p248 = scmp.eq.s32.totalorder %s34, 1
      %p249 = por %p247, %p248
      %p250 = scmp.ne.s32.totalorder %s241, %s242
      %p251 = scmp.eq.s32.totalorder %s34, 0
      %p252 = por %p250, %p251
      %p253 = scmp.ne.s32.totalorder %s241, %s242
      %p254 = scmp.eq.s32.totalorder %s35, 1
      %p255 = por %p253, %p254
      %p257 = scmp.ne.s32.totalorder %s242, %s256
      %p258 = scmp.eq.s32.totalorder %s35, 0
      %p259 = por %p257, %p258
      %s261 = sadd.s32 %s260, 1
      %p264 = scmp.eq.s32.totalorder %s29, 1
      %p265 = scmp.ne.s32.totalorder %s260, %s262
      %p266 = scmp.eq.s32.totalorder %s29, 0
      %p267 = por %p265, %p266
      %p268 = scmp.ne.s32.totalorder %s260, %s262
      %p269 = scmp.eq.s32.totalorder %s34, 1
      %p270 = por %p268, %p269
      %p271 = scmp.ne.s32.totalorder %s262, %s263
      %p272 = scmp.eq.s32.totalorder %s34, 0
      %p273 = por %p271, %p272
      %p274 = scmp.ne.s32.totalorder %s262, %s263
      %p275 = scmp.eq.s32.totalorder %s35, 1
      %p276 = por %p274, %p275
      %p278 = scmp.ne.s32.totalorder %s263, %s277
      %p279 = scmp.eq.s32.totalorder %s35, 0
      %p280 = por %p278, %p279
      %s282 = sadd.s32 %s281, 1
      %p285 = scmp.eq.s32.totalorder %s29, 1
      %p286 = scmp.ne.s32.totalorder %s281, %s283
      %p287 = scmp.eq.s32.totalorder %s29, 0
      %p288 = por %p286, %p287
      %p289 = scmp.ne.s32.totalorder %s281, %s283
      %p290 = scmp.eq.s32.totalorder %s34, 1
      %p291 = por %p289, %p290
      %p292 = scmp.ne.s32.totalorder %s283, %s284
      %p293 = scmp.eq.s32.totalorder %s34, 0
      %p294 = por %p292, %p293
      %p295 = scmp.ne.s32.totalorder %s283, %s284
      %p296 = scmp.eq.s32.totalorder %s35, 1
      %p297 = por %p295, %p296
      %p299 = scmp.ne.s32.totalorder %s284, %s298
      %p300 = scmp.eq.s32.totalorder %s35, 0
      %p301 = por %p299, %p300
      %s303 = sadd.s32 %s302, 1
      %p306 = scmp.eq.s32.totalorder %s29, 1
      %p307 = scmp.ne.s32.totalorder %s302, %s304
      %p308 = scmp.eq.s32.totalorder %s29, 0
      %p309 = por %p307, %p308
      %p310 = scmp.ne.s32.totalorder %s302, %s304
      %p311 = scmp.eq.s32.totalorder %s34, 1
      %p312 = por %p310, %p311
      %p313 = scmp.ne.s32.totalorder %s304, %s305
      %p314 = scmp.eq.s32.totalorder %s34, 0
      %p315 = por %p313, %p314
      %p316 = scmp.ne.s32.totalorder %s304, %s305
      %p317 = scmp.eq.s32.totalorder %s35, 1
      %p318 = por %p316, %p317
      %p320 = scmp.ne.s32.totalorder %s305, %s319
      %p321 = scmp.eq.s32.totalorder %s35, 0
      %p322 = por %p320, %p321
      %s324 = sadd.s32 %s323, 1
      %p327 = scmp.eq.s32.totalorder %s29, 1
      %p328 = scmp.ne.s32.totalorder %s323, %s325
      %p329 = scmp.eq.s32.totalorder %s29, 0
      %p330 = por %p328, %p329
      %p331 = scmp.ne.s32.totalorder %s323, %s325
      %p332 = scmp.eq.s32.totalorder %s34, 1
      %p333 = por %p331, %p332
      %p334 = scmp.ne.s32.totalorder %s325, %s326
      %p335 = scmp.eq.s32.totalorder %s34, 0
      %p336 = por %p334, %p335
      %p337 = scmp.ne.s32.totalorder %s325, %s326
      %p338 = scmp.eq.s32.totalorder %s35, 1
      %p339 = por %p337, %p338
      %p341 = scmp.ne.s32.totalorder %s326, %s340
      %p342 = scmp.eq.s32.totalorder %s35, 0
      %p343 = por %p341, %p342
      %s345 = sadd.s32 %s344, 1
      %p348 = scmp.eq.s32.totalorder %s29, 1
      %p349 = scmp.ne.s32.totalorder %s344, %s346
      %p350 = scmp.eq.s32.totalorder %s29, 0
      %p351 = por %p349, %p350
      %p352 = scmp.ne.s32.totalorder %s344, %s346
      %p353 = scmp.eq.s32.totalorder %s34, 1
      %p354 = por %p352, %p353
      %p355 = scmp.ne.s32.totalorder %s346, %s347
      %p356 = scmp.eq.s32.totalorder %s34, 0
      %p357 = por %p355, %p356
      %p358 = scmp.ne.s32.totalorder %s346, %s347
      %p359 = scmp.eq.s32.totalorder %s35, 1
      %p360 = por %p358, %p359
      %p362 = scmp.ne.s32.totalorder %s347, %s361
      %p363 = scmp.eq.s32.totalorder %s35, 0
      %p364 = por %p362, %p363
      %s366 = sadd.s32 %s365, 1
      %p369 = scmp.eq.s32.totalorder %s29, 1
      %p370 = scmp.ne.s32.totalorder %s365, %s367
      %p371 = scmp.eq.s32.totalorder %s29, 0
      %p372 = por %p370, %p371
      %p373 = scmp.ne.s32.totalorder %s365, %s367
      %p374 = scmp.eq.s32.totalorder %s34, 1
      %p375 = por %p373, %p374
      %p376 = scmp.ne.s32.totalorder %s367, %s368
      %p377 = scmp.eq.s32.totalorder %s34, 0
      %p378 = por %p376, %p377
      %p379 = scmp.ne.s32.totalorder %s367, %s368
      %p380 = scmp.eq.s32.totalorder %s35, 1
      %p381 = por %p379, %p380
      %p383 = scmp.ne.s32.totalorder %s368, %s382
      %p384 = scmp.eq.s32.totalorder %s35, 0
      %p385 = por %p383, %p384
      %s387 = sadd.s32 %s386, 1
      %p390 = scmp.eq.s32.totalorder %s29, 1
      %p391 = scmp.ne.s32.totalorder %s386, %s388
      %p392 = scmp.eq.s32.totalorder %s29, 0
      %p393 = por %p391, %p392
      %p394 = scmp.ne.s32.totalorder %s386, %s388
      %p395 = scmp.eq.s32.totalorder %s34, 1
      %p396 = por %p394, %p395
      %p397 = scmp.ne.s32.totalorder %s388, %s389
      %p398 = scmp.eq.s32.totalorder %s34, 0
      %p399 = por %p397, %p398
      %p400 = scmp.ne.s32.totalorder %s388, %s389
      %p401 = scmp.eq.s32.totalorder %s35, 1
      %p402 = por %p400, %p401
      %p404 = scmp.ne.s32.totalorder %s389, %s403
      %p405 = scmp.eq.s32.totalorder %s35, 0
      %p406 = por %p404, %p405
      %s408 = sadd.s32 %s407, 1
      %p411 = scmp.eq.s32.totalorder %s29, 1
      %p412 = scmp.ne.s32.totalorder %s407, %s409
      %p413 = scmp.eq.s32.totalorder %s29, 0
      %p414 = por %p412, %p413
      %p415 = scmp.ne.s32.totalorder %s407, %s409
      %p416 = scmp.eq.s32.totalorder %s34, 1
      %p417 = por %p415, %p416
      %p418 = scmp.ne.s32.totalorder %s409, %s410
      %p419 = scmp.eq.s32.totalorder %s34, 0
      %p420 = por %p418, %p419
      %p421 = scmp.ne.s32.totalorder %s409, %s410
      %p422 = scmp.eq.s32.totalorder %s35, 1
      %p423 = por %p421, %p422
      %p425 = scmp.ne.s32.totalorder %s410, %s424
      %p426 = scmp.eq.s32.totalorder %s35, 0
      %p427 = por %p425, %p426
      %s429 = sadd.s32 %s428, 1
      %p432 = scmp.eq.s32.totalorder %s29, 1
      %p433 = scmp.ne.s32.totalorder %s428, %s430
      %p434 = scmp.eq.s32.totalorder %s29, 0
      %p435 = por %p433, %p434
      %p436 = scmp.ne.s32.totalorder %s428, %s430
      %p437 = scmp.eq.s32.totalorder %s34, 1
      %p438 = por %p436, %p437
      %p439 = scmp.ne.s32.totalorder %s430, %s431
      %p440 = scmp.eq.s32.totalorder %s34, 0
      %p441 = por %p439, %p440
      %p442 = scmp.ne.s32.totalorder %s430, %s431
      %p443 = scmp.eq.s32.totalorder %s35, 1
      %p444 = por %p442, %p443
      %p446 = scmp.ne.s32.totalorder %s431, %s445
      %p447 = scmp.eq.s32.totalorder %s35, 0
      %p448 = por %p446, %p447
      %s450 = sadd.s32 %s449, 1
      %p453 = scmp.eq.s32.totalorder %s29, 1
      %p454 = scmp.ne.s32.totalorder %s449, %s451
      %p455 = scmp.eq.s32.totalorder %s29, 0
      %p456 = por %p454, %p455
      %p457 = scmp.ne.s32.totalorder %s449, %s451
      %p458 = scmp.eq.s32.totalorder %s34, 1
      %p459 = por %p457, %p458
      %p460 = scmp.ne.s32.totalorder %s451, %s452
      %p461 = scmp.eq.s32.totalorder %s34, 0
      %p462 = por %p460, %p461
      %p463 = scmp.ne.s32.totalorder %s451, %s452
      %p464 = scmp.eq.s32.totalorder %s35, 1
      %p465 = por %p463, %p464
      %p467 = scmp.ne.s32.totalorder %s452, %s466
      %p468 = scmp.eq.s32.totalorder %s35, 0
      %p469 = por %p467, %p468
      %s471 = sadd.s32 %s470, 1
      %p474 = scmp.eq.s32.totalorder %s29, 1
      %p475 = scmp.ne.s32.totalorder %s470, %s472
      %p476 = scmp.eq.s32.totalorder %s29, 0
      %p477 = por %p475, %p476
      %p478 = scmp.ne.s32.totalorder %s470, %s472
      %p479 = scmp.eq.s32.totalorder %s34, 1
      %p480 = por %p478, %p479
      %p481 = scmp.ne.s32.totalorder %s472, %s473
      %p482 = scmp.eq.s32.totalorder %s34, 0
      %p483 = por %p481, %p482
      %p484 = scmp.ne.s32.totalorder %s472, %s473
      %p485 = scmp.eq.s32.totalorder %s35, 1
      %p486 = por %p484, %p485
      %p488 = scmp.ne.s32.totalorder %s473, %s487
      %p489 = scmp.eq.s32.totalorder %s35, 0
      %p490 = por %p488, %p489
      %s491 = ssub.s32 %s36, %s48
      %s492 = ssub.s32 %s37, %s44
      %s493 = sor.u32 %s491, %s492
      %p494 = scmp.eq.s32.totalorder %s493, 0
      %s496 = sadd.s32 %s495, 1
      %s497 = scalar_select %p494, %s495, %s496
      %p500 = pneg %p494
      %p501 = scmp.eq.s32.totalorder %s29, 1
      %p502 = por %p500, %p501
      %p503 = scmp.ne.s32.totalorder %s495, %s498
      %p504 = scmp.eq.s32.totalorder %s29, 0
      %p505 = por %p503, %p504
      %p506 = scmp.ne.s32.totalorder %s495, %s498
      %p507 = scmp.eq.s32.totalorder %s34, 1
      %p508 = por %p506, %p507
      %p509 = scmp.ne.s32.totalorder %s498, %s499
      %p510 = scmp.eq.s32.totalorder %s34, 0
      %p511 = por %p509, %p510
      %p512 = scmp.ne.s32.totalorder %s498, %s499
      %p513 = scmp.eq.s32.totalorder %s35, 1
      %p514 = por %p512, %p513
      %p516 = scmp.ne.s32.totalorder %s499, %s515
      %p517 = scmp.eq.s32.totalorder %s35, 0
      %p518 = por %p516, %p517
      %p519 = scmp.le.s32.totalorder 1, %s29
      %p520 = scmp.lt.s32.totalorder %s29, 3
      %p521 = pnand %p519, %p520
      %p522 = pneg %p521
      // Predicated region
      $region9: #{tpu_custom_call.1} parent=5 // pred_check
        _
      $region10: #{tpu_custom_call.1} parent=5 // pred_check_branch
        %524 = sbr.rel (%p521) target = $region12
      $region11: #{tpu_custom_call.1} parent=5 // pred_region
        %s525 = ssub.s32 %s29, 1
        // Predicated region
        $region13: #{tpu_custom_call.1} parent=11 // pred_check
          %p526 = pneg %p121
        $region14: #{tpu_custom_call.1} parent=11 // pred_check_branch
          %528 = sbr.rel (%p526) target = $region16
        $region15: #{tpu_custom_call.1} parent=11 // pred_region
          %p529 = scmp.lt.s32.totalorder %s39, 0
          %s530 = scalar_select %p529, %s39, 0
          %s531 = smul.addr %s530, 8
          %s532 = scalar_lea.vmem %s2, %s531
        $region16: #{tpu_custom_call.1} parent=11 // pred_fallthru
          _
        // Predicated region
        $region17: #{tpu_custom_call.1} parent=11 // pred_check
          %p533 = pneg %p147
        $region18: #{tpu_custom_call.1} parent=11 // pred_check_branch
          %535 = sbr.rel (%p533) target = $region20
        $region19: #{tpu_custom_call.1} parent=11 // pred_region
          %p536 = scmp.lt.s32.totalorder %s39, 0
          %s537 = scalar_select %p536, %s39, 0
          %s538 = smul.addr %s537, 8
          %s539 = scalar_lea.vmem %s3, %s538
        $region20: #{tpu_custom_call.1} parent=11 // pred_fallthru
          _
        // Predicated region
        $region21: #{tpu_custom_call.1} parent=11 // pred_check
          %p540 = pneg %p168
        $region22: #{tpu_custom_call.1} parent=11 // pred_check_branch
          %542 = sbr.rel (%p540) target = $region24
        $region23: #{tpu_custom_call.1} parent=11 // pred_region
          _
        $region24: #{tpu_custom_call.1} parent=11 // pred_fallthru
          _
        // Predicated region
        $region25: #{tpu_custom_call.1} parent=11 // pred_check
          %p543 = pneg %p189
        $region26: #{tpu_custom_call.1} parent=11 // pred_check_branch
          %545 = sbr.rel (%p543) target = $region28
        $region27: #{tpu_custom_call.1} parent=11 // pred_region
          _
        $region28: #{tpu_custom_call.1} parent=11 // pred_fallthru
          _
        // Predicated region
        $region29: #{tpu_custom_call.1} parent=11 // pred_check
          %p546 = pneg %p210
        $region30: #{tpu_custom_call.1} parent=11 // pred_check_branch
          %548 = sbr.rel (%p546) target = $region32
        $region31: #{tpu_custom_call.1} parent=11 // pred_region
          _
        $region32: #{tpu_custom_call.1} parent=11 // pred_fallthru
          _
        // Predicated region
        $region33: #{tpu_custom_call.1} parent=11 // pred_check
          %p549 = pneg %p231
        $region34: #{tpu_custom_call.1} parent=11 // pred_check_branch
          %551 = sbr.rel (%p549) target = $region36
        $region35: #{tpu_custom_call.1} parent=11 // pred_region
          _
        $region36: #{tpu_custom_call.1} parent=11 // pred_fallthru
          _
        // Predicated region
        $region37: #{tpu_custom_call.1} parent=11 // pred_check
          %p552 = pneg %p252
        $region38: #{tpu_custom_call.1} parent=11 // pred_check_branch
          %554 = sbr.rel (%p552) target = $region40
        $region39: #{tpu_custom_call.1} parent=11 // pred_region
          _
        $region40: #{tpu_custom_call.1} parent=11 // pred_fallthru
          _
        // Predicated region
        $region41: #{tpu_custom_call.1} parent=11 // pred_check
          %p555 = pneg %p273
        $region42: #{tpu_custom_call.1} parent=11 // pred_check_branch
          %557 = sbr.rel (%p555) target = $region44
        $region43: #{tpu_custom_call.1} parent=11 // pred_region
          _
        $region44: #{tpu_custom_call.1} parent=11 // pred_fallthru
          _
        // Predicated region
        $region45: #{tpu_custom_call.1} parent=11 // pred_check
          %p558 = pneg %p294
        $region46: #{tpu_custom_call.1} parent=11 // pred_check_branch
          %560 = sbr.rel (%p558) target = $region48
        $region47: #{tpu_custom_call.1} parent=11 // pred_region
          _
        $region48: #{tpu_custom_call.1} parent=11 // pred_fallthru
          _
        // Predicated region
        $region49: #{tpu_custom_call.1} parent=11 // pred_check
          %p561 = pneg %p315
        $region50: #{tpu_custom_call.1} parent=11 // pred_check_branch
          %563 = sbr.rel (%p561) target = $region52
        $region51: #{tpu_custom_call.1} parent=11 // pred_region
          _
        $region52: #{tpu_custom_call.1} parent=11 // pred_fallthru
          _
        // Predicated region
        $region53: #{tpu_custom_call.1} parent=11 // pred_check
          %p564 = pneg %p336
        $region54: #{tpu_custom_call.1} parent=11 // pred_check_branch
          %566 = sbr.rel (%p564) target = $region56
        $region55: #{tpu_custom_call.1} parent=11 // pred_region
          _
        $region56: #{tpu_custom_call.1} parent=11 // pred_fallthru
          _
        // Predicated region
        $region57: #{tpu_custom_call.1} parent=11 // pred_check
          %p567 = pneg %p357
        $region58: #{tpu_custom_call.1} parent=11 // pred_check_branch
          %569 = sbr.rel (%p567) target = $region60
        $region59: #{tpu_custom_call.1} parent=11 // pred_region
          _
        $region60: #{tpu_custom_call.1} parent=11 // pred_fallthru
          _
        // Predicated region
        $region61: #{tpu_custom_call.1} parent=11 // pred_check
          %p570 = pneg %p378
        $region62: #{tpu_custom_call.1} parent=11 // pred_check_branch
          %572 = sbr.rel (%p570) target = $region64
        $region63: #{tpu_custom_call.1} parent=11 // pred_region
          _
        $region64: #{tpu_custom_call.1} parent=11 // pred_fallthru
          _
        // Predicated region
        $region65: #{tpu_custom_call.1} parent=11 // pred_check
          %p573 = pneg %p399
        $region66: #{tpu_custom_call.1} parent=11 // pred_check_branch
          %575 = sbr.rel (%p573) target = $region68
        $region67: #{tpu_custom_call.1} parent=11 // pred_region
          _
        $region68: #{tpu_custom_call.1} parent=11 // pred_fallthru
          _
        // Predicated region
        $region69: #{tpu_custom_call.1} parent=11 // pred_check
          %p576 = pneg %p420
        $region70: #{tpu_custom_call.1} parent=11 // pred_check_branch
          %578 = sbr.rel (%p576) target = $region72
        $region71: #{tpu_custom_call.1} parent=11 // pred_region
          _
        $region72: #{tpu_custom_call.1} parent=11 // pred_fallthru
          _
        // Predicated region
        $region73: #{tpu_custom_call.1} parent=11 // pred_check
          %p579 = pneg %p441
        $region74: #{tpu_custom_call.1} parent=11 // pred_check_branch
          %581 = sbr.rel (%p579) target = $region76
        $region75: #{tpu_custom_call.1} parent=11 // pred_region
          _
        $region76: #{tpu_custom_call.1} parent=11 // pred_fallthru
          _
        // Predicated region
        $region77: #{tpu_custom_call.1} parent=11 // pred_check
          %p582 = pneg %p462
        $region78: #{tpu_custom_call.1} parent=11 // pred_check_branch
          %584 = sbr.rel (%p582) target = $region80
        $region79: #{tpu_custom_call.1} parent=11 // pred_region
          _
        $region80: #{tpu_custom_call.1} parent=11 // pred_fallthru
          _
        // Predicated region
        $region81: #{tpu_custom_call.1} parent=11 // pred_check
          %p585 = pneg %p483
        $region82: #{tpu_custom_call.1} parent=11 // pred_check_branch
          %587 = sbr.rel (%p585) target = $region84
        $region83: #{tpu_custom_call.1} parent=11 // pred_region
          _
        $region84: #{tpu_custom_call.1} parent=11 // pred_fallthru
          _
      $region12: #{tpu_custom_call.1} parent=5 // pred_fallthru
        _
      %p588 = scmp.lt.s32.totalorder %s29, 2
      // Predicated region
      $region85: #{tpu_custom_call.1} parent=5 // pred_check
        %p589 = pneg %p588
      $region86: #{tpu_custom_call.1} parent=5 // pred_check_branch
        %591 = sbr.rel (%p589) target = $region88
      $region87: #{tpu_custom_call.1} parent=5 // pred_region
        // Predicated region
        $region89: #{tpu_custom_call.1} parent=87 // pred_check
          %p592 = pneg %p63
        $region90: #{tpu_custom_call.1} parent=87 // pred_check_branch
          %594 = sbr.rel (%p592) target = $region92
        $region91: #{tpu_custom_call.1} parent=87 // pred_region
          %p595 = scmp.lt.s32.totalorder %s36, 1
          %s596 = scalar_select %p595, %s36, 1
          %p597 = scmp.lt.s32.totalorder %s37, 0
          %s598 = scalar_select %p597, %s37, 0
          %s599 = sadd.s32 %s598, %s596
          %s600 = smul.addr %s599, 8
          %s601 = scalar_lea.vmem %s0, %s600
        $region92: #{tpu_custom_call.1} parent=87 // pred_fallthru
          _
        // Predicated region
        $region93: #{tpu_custom_call.1} parent=87 // pred_check
          %p602 = pneg %p89
        $region94: #{tpu_custom_call.1} parent=87 // pred_check_branch
          %604 = sbr.rel (%p602) target = $region96
        $region95: #{tpu_custom_call.1} parent=87 // pred_region
          %p605 = scmp.lt.s32.totalorder %s36, 1
          %s606 = scalar_select %p605, %s36, 1
          %s607 = smul.addr %s606, 8
          %s608 = scalar_lea.vmem %s1, %s607
        $region96: #{tpu_custom_call.1} parent=87 // pred_fallthru
          _
      $region88: #{tpu_custom_call.1} parent=5 // pred_fallthru
        _
      %p609 = scmp.le.s32.totalorder 1, %s29
      %p610 = scmp.lt.s32.totalorder %s29, 3
      %p611 = pnand %p609, %p610
      %p612 = pneg %p611
      // Predicated region
      $region97: #{tpu_custom_call.1} parent=5 // pred_check
        _
      $region98: #{tpu_custom_call.1} parent=5 // pred_check_branch
        %614 = sbr.rel (%p611) target = $region100
      $region99: #{tpu_custom_call.1} parent=5 // pred_region
        %s615 = ssub.s32 %s29, 1
        %p616 = scmp.lt.s32.totalorder %s38, 1
        %s617 = scalar_select %p616, %s38, 1
        %p618 = scmp.lt.s32.totalorder %s39, 0
        %s619 = scalar_select %p618, %s39, 0
        %s620 = sadd.s32 %s619, %s617
        %s621 = smul.addr %s620, 8
        %s622 = scalar_lea.vmem %s0, %s621
        %p623 = pneg %p69
        %p624 = pneg %p66
        %p625 = scmp.lt.s32.totalorder %s38, 1
        %s626 = scalar_select %p625, %s38, 1
        %s627 = smul.addr %s626, 8
        %s628 = scalar_lea.vmem %s1, %s627
        %p629 = pneg %p95
        %p630 = pneg %p92
        %p631 = scmp.lt.s32.totalorder %s39, 0
        %s632 = scalar_select %p631, %s39, 0
        %s633 = smul.addr %s632, 8
        %s634 = scalar_lea.vmem %s2, %s633
        %p635 = pneg %p121
        %p636 = pneg %p118
        %p637 = scmp.lt.s32.totalorder %s39, 0
        %s638 = scalar_select %p637, %s39, 0
        %s639 = smul.addr %s638, 8
        %s640 = scalar_lea.vmem %s3, %s639
        %p641 = pneg %p147
        %p642 = pneg %p144
        %p643 = pneg %p168
        %p644 = pneg %p165
        %p645 = pneg %p189
        %p646 = pneg %p186
        %p647 = pneg %p210
        %p648 = pneg %p207
        %p649 = pneg %p231
        %p650 = pneg %p228
        %p651 = pneg %p252
        %p652 = pneg %p249
        %p653 = pneg %p273
        %p654 = pneg %p270
        %p655 = pneg %p294
        %p656 = pneg %p291
        %p657 = pneg %p315
        %p658 = pneg %p312
        %p659 = pneg %p336
        %p660 = pneg %p333
        %p661 = pneg %p357
        %p662 = pneg %p354
        %p663 = pneg %p378
        %p664 = pneg %p375
        %p665 = pneg %p399
        %p666 = pneg %p396
        %p667 = pneg %p420
        %p668 = pneg %p417
        %p669 = pneg %p441
        %p670 = pneg %p438
        %p671 = pneg %p462
        %p672 = pneg %p459
        %p673 = pneg %p483
        %p674 = pneg %p480
        %p675 = pneg %p511
        %p676 = pneg %p508
        %s677 = sand.u32 %s498, 1
        %s678 = scalar_lea.sflag [#allocation6], %s677
        %s679 = sand.u32 %s498, 1
        %s680 = smul.addr %s679, 8
        %s681 = scalar_lea.vmem [#allocation5], %s680
        %p682 = scmp.lt.s32.totalorder %s38, 1
        %s683 = scalar_select %p682, %s38, 1
        %p684 = scmp.lt.s32.totalorder %s39, 0
        %s685 = scalar_select %p684, %s39, 0
        %s686 = sadd.s32 %s685, %s683
        %s687 = smul.addr %s686, 8
        %s688 = scalar_lea.vmem %s0, %s687
        %p689 = scmp.lt.s32.totalorder %s38, 1
        %s690 = scalar_select %p689, %s38, 1
        %s691 = smul.addr %s690, 8
        %s692 = scalar_lea.vmem %s1, %s691
        %p693 = scmp.lt.s32.totalorder %s39, 0
        %s694 = scalar_select %p693, %s39, 0
        %s695 = smul.addr %s694, 8
        %s696 = scalar_lea.vmem %s2, %s695
        %p697 = scmp.lt.s32.totalorder %s39, 0
        %s698 = scalar_select %p697, %s39, 0
        %s699 = smul.addr %s698, 8
        %s700 = scalar_lea.vmem %s3, %s699
        %v701 = vld [vmem:[%s688] sm:$0xff]
        %s702 = smul.u32 %s39, 8
        %v703 = vld [vmem:[%s16] sm:$0x1]
        %v704 = vld [vmem:[%s17] sm:$0x1]
        %p705 = scmp.eq.s32.totalorder %s39, 0
        // Predicated region
        $region101: #{tpu_custom_call.1} parent=99 // pred_check
          %p706 = pneg %p705
        $region102: #{tpu_custom_call.1} parent=99 // pred_check_branch
          %708 = sbr.rel (%p706) target = $region104
        $region103: #{tpu_custom_call.1} parent=99 // pred_region
          %v709 = vld [vmem:[%s692] sm:$0xff]
          %vm710 = vcmask 261120
          %v711 = vsel %vm710, %v709, 0.0
          %712 = vadd.xlane.f32.xlu0 %v711
          %v713 = vpop.xlane.xlu0 %712
          %v714 = vrcp.pop 32.0
          %v715 = vmul.f32 %v713, %v714
          %v716 = vsub.f32 %v709, %v715
          %v717 = vmul.f32 %v716, %v716
          %v718 = vsel %vm710, %v717, 0.0
          %719 = vadd.xlane.f32.xlu0 %v718
          %v720 = vpop.xlane.xlu0 %719
          %v721 = vmul.f32 %v720, %v714
          %v722 = vadd.f32 %v721, 1e-05
          %v723 = vrsqrt.pop %v722
          %v724 = vmul.f32 %v716, %v723
          %v726 = vlaneseq
          %v727 = vshrl.u32 %v726, 7
          %v728 = vsub.s32 0, %v727
          %v729 = vrot.slane %v703, %v728
          %v731 = vmul.f32 %v724, %v729
          %v733 = vlaneseq
          %v734 = vshrl.u32 %v733, 7
          %v735 = vsub.s32 0, %v734
          %v736 = vrot.slane %v704, %v735
          %v738 = vadd.f32 %v731, %v736
          %v739 = vld [vmem:[%s8] sm:$0xff]
          %v740 = vld [vmem:[%s8 + $0x8] sm:$0xff]
          %v741 = vld [vmem:[%s8 + $0x10] sm:$0xff]
          %v742 = vld [vmem:[%s8 + $0x18] sm:$0xff]
          %v744 = vsel %vm710, %v738, 0
          %746 = vmatprep.subr.mxu0 0.0
          %747 = vmatpush1.msra.mxu0 %v739
          %748 = vmatprep.subr.mxu0 0.0
          %749 = vmatpush1.msra.mxu0 %v740
          %750 = vmatprep.subr.mxu0 0.0
          %751 = vmatpush1.msra.mxu0 %v741
          %752 = vmatprep.subr.mxu0 0.0
          %753 = vmatpush1.msra.mxu0 %v742
          %754 = vmatprep.subr.mxu0 0.0
          %755 = vmatpush1.msra.mxu0 0.0
          %756 = vmatprep.subr.mxu0 0.0
          %757 = vmatpush1.msra.mxu0 0.0
          %758 = vmatprep.subr.mxu0 0.0
          %759 = vmatpush1.msra.mxu0 0.0
          %760 = vmatprep.subr.mxu0 0.0
          %761 = vmatpush1.msra.mxu0 0.0
          %762 = vmatprep.subr.mxu0 0.0
          %763 = vmatpush1.msra.mxu0 0.0
          %764 = vmatprep.subr.mxu0 0.0
          %765 = vmatpush1.msra.mxu0 0.0
          %766 = vmatprep.subr.mxu0 0.0
          %767 = vmatpush1.msra.mxu0 0.0
          %768 = vmatprep.subr.mxu0 0.0
          %769 = vmatpush1.msra.mxu0 0.0
          %770 = vmatprep.subr.mxu0 0.0
          %771 = vmatpush1.msra.mxu0 0.0
          %772 = vmatprep.subr.mxu0 0.0
          %773 = vmatpush1.msra.mxu0 0.0
          %774 = vmatprep.subr.mxu0 0.0
          %775 = vmatpush1.msra.mxu0 0.0
          %776 = vmatprep.subr.mxu0 0.0
          %777 = vmatpush1.msra.mxu0 0.0
          %778 = vmatprep.subr.mxu0 0.0
          %779 = vmatpush1.msra.mxu0 0.0
          %780 = vmatprep.subr.mxu0 0.0
          %781 = vmatpush1.msra.mxu0 0.0
          %782 = vmatprep.subr.mxu0 0.0
          %783 = vmatpush1.msra.mxu0 0.0
          %784 = vmatprep.subr.mxu0 0.0
          %785 = vmatpush1.msra.mxu0 0.0
          %786 = vmatprep.subr.mxu0 0.0
          %787 = vmatpush1.msra.mxu0 0.0
          %788 = vmatprep.subr.mxu0 0.0
          %789 = vmatpush1.msra.mxu0 0.0
          %790 = vmatprep.subr.mxu0 0.0
          %791 = vmatpush1.msra.mxu0 0.0
          %792 = vmatprep.subr.mxu0 0.0
          %793 = vmatpush1.msra.mxu0 0.0
          %794 = vmatprep.subr.mxu0 0.0
          %795 = vmatpush1.msra.mxu0 0.0
          %796 = vmatprep.subr.mxu0 0.0
          %797 = vmatpush1.msra.mxu0 0.0
          %798 = vmatprep.subr.mxu0 0.0
          %799 = vmatpush1.msra.mxu0 0.0
          %800 = vmatprep.subr.mxu0 0.0
          %801 = vmatpush1.msra.mxu0 0.0
          %802 = vmatprep.subr.mxu0 0.0
          %803 = vmatpush1.msra.mxu0 0.0
          %804 = vmatprep.subr.mxu0 0.0
          %805 = vmatpush1.msra.mxu0 0.0
          %806 = vmatprep.subr.mxu0 0.0
          %807 = vmatpush1.msra.mxu0 0.0
          %808 = vmatprep.subr.mxu0 0.0
          %809 = vmatpush1.msra.mxu0 0.0
          %810 = vmatprep.mubr.f32.mxu0 0.0
          %811 = vmatmul.mubr.f32.gmra.mrb[0].mxu0 %v744
          %v812 = vpop.f32.mrb[0].mxu0
          %v813 = vadd.f32 0.0, %v812
          %v814 = vpop.f32.mrb[0].mxu0
          %815 = vdwg.mxu0
          %v816 = vld [vmem:[%s9] sm:$0xff]
          %v817 = vld [vmem:[%s9 + $0x8] sm:$0xff]
          %v818 = vld [vmem:[%s9 + $0x10] sm:$0xff]
          %v819 = vld [vmem:[%s9 + $0x18] sm:$0xff]
          %820 = vmatprep.subr.mxu0 0.0
          %821 = vmatpush1.msra.mxu0 %v816
          %822 = vmatprep.subr.mxu0 0.0
          %823 = vmatpush1.msra.mxu0 %v817
          %824 = vmatprep.subr.mxu0 0.0
          %825 = vmatpush1.msra.mxu0 %v818
          %826 = vmatprep.subr.mxu0 0.0
          %827 = vmatpush1.msra.mxu0 %v819
          %828 = vmatprep.subr.mxu0 0.0
          %829 = vmatpush1.msra.mxu0 0.0
          %830 = vmatprep.subr.mxu0 0.0
          %831 = vmatpush1.msra.mxu0 0.0
          %832 = vmatprep.subr.mxu0 0.0
          %833 = vmatpush1.msra.mxu0 0.0
          %834 = vmatprep.subr.mxu0 0.0
          %835 = vmatpush1.msra.mxu0 0.0
          %836 = vmatprep.subr.mxu0 0.0
          %837 = vmatpush1.msra.mxu0 0.0
          %838 = vmatprep.subr.mxu0 0.0
          %839 = vmatpush1.msra.mxu0 0.0
          %840 = vmatprep.subr.mxu0 0.0
          %841 = vmatpush1.msra.mxu0 0.0
          %842 = vmatprep.subr.mxu0 0.0
          %843 = vmatpush1.msra.mxu0 0.0
          %844 = vmatprep.subr.mxu0 0.0
          %845 = vmatpush1.msra.mxu0 0.0
          %846 = vmatprep.subr.mxu0 0.0
          %847 = vmatpush1.msra.mxu0 0.0
          %848 = vmatprep.subr.mxu0 0.0
          %849 = vmatpush1.msra.mxu0 0.0
          %850 = vmatprep.subr.mxu0 0.0
          %851 = vmatpush1.msra.mxu0 0.0
          %852 = vmatprep.subr.mxu0 0.0
          %853 = vmatpush1.msra.mxu0 0.0
          %854 = vmatprep.subr.mxu0 0.0
          %855 = vmatpush1.msra.mxu0 0.0
          %856 = vmatprep.subr.mxu0 0.0
          %857 = vmatpush1.msra.mxu0 0.0
          %858 = vmatprep.subr.mxu0 0.0
          %859 = vmatpush1.msra.mxu0 0.0
          %860 = vmatprep.subr.mxu0 0.0
          %861 = vmatpush1.msra.mxu0 0.0
          %862 = vmatprep.subr.mxu0 0.0
          %863 = vmatpush1.msra.mxu0 0.0
          %864 = vmatprep.subr.mxu0 0.0
          %865 = vmatpush1.msra.mxu0 0.0
          %866 = vmatprep.subr.mxu0 0.0
          %867 = vmatpush1.msra.mxu0 0.0
          %868 = vmatprep.subr.mxu0 0.0
          %869 = vmatpush1.msra.mxu0 0.0
          %870 = vmatprep.subr.mxu0 0.0
          %871 = vmatpush1.msra.mxu0 0.0
          %872 = vmatprep.subr.mxu0 0.0
          %873 = vmatpush1.msra.mxu0 0.0
          %874 = vmatprep.subr.mxu0 0.0
          %875 = vmatpush1.msra.mxu0 0.0
          %876 = vmatprep.subr.mxu0 0.0
          %877 = vmatpush1.msra.mxu0 0.0
          %878 = vmatprep.subr.mxu0 0.0
          %879 = vmatpush1.msra.mxu0 0.0
          %880 = vmatprep.subr.mxu0 0.0
          %881 = vmatpush1.msra.mxu0 0.0
          %882 = vmatprep.subr.mxu0 0.0
          %883 = vmatpush1.msra.mxu0 0.0
          %884 = vmatprep.mubr.f32.mxu0 0.0
          %885 = vmatmul.mubr.f32.gmra.mrb[0].mxu0 %v744
          %v886 = vpop.f32.mrb[0].mxu0
          %v887 = vadd.f32 0.0, %v886
          %v888 = vpop.f32.mrb[0].mxu0
          %889 = vdwg.mxu0
          %v890 = vld [vmem:[%s4] sm:$0xff]
          %892 = vrot.lane.b32.xlu0 %v890, 8
          %v893 = vpop.permute.xlu0 %892
          %vm895 = vcmask 64512
          %v896 = vsel %vm895, %v890, %v893
          %v897 = vld [vmem:[%s5] sm:$0xff]
          %899 = vrot.lane.b32.xlu0 %v897, 8
          %v900 = vpop.permute.xlu0 %899
          %v902 = vsel %vm895, %v897, %v900
          %v903 = vmul.f32 %v813, %v896
          %v904 = vmul.f32 %v887, %v902
          %v905 = vadd.f32 %v903, %v904
          %vm906 = vcmask 130048
          %907 = vst.msk [vmem:[#allocation2] sm:$0xff] %vm906, %v905
          %v908 = vld [vmem:[%s10] sm:$0xff]
          %v909 = vld [vmem:[%s10 + $0x8] sm:$0xff]
          %v910 = vld [vmem:[%s10 + $0x10] sm:$0xff]
          %v911 = vld [vmem:[%s10 + $0x18] sm:$0xff]
          %912 = vmatprep.subr.mxu0 0.0
          %913 = vmatpush1.msra.mxu0 %v908
          %914 = vmatprep.subr.mxu0 0.0
          %915 = vmatpush1.msra.mxu0 %v909
          %916 = vmatprep.subr.mxu0 0.0
          %917 = vmatpush1.msra.mxu0 %v910
          %918 = vmatprep.subr.mxu0 0.0
          %919 = vmatpush1.msra.mxu0 %v911
          %920 = vmatprep.subr.mxu0 0.0
          %921 = vmatpush1.msra.mxu0 0.0
          %922 = vmatprep.subr.mxu0 0.0
          %923 = vmatpush1.msra.mxu0 0.0
          %924 = vmatprep.subr.mxu0 0.0
          %925 = vmatpush1.msra.mxu0 0.0
          %926 = vmatprep.subr.mxu0 0.0
          %927 = vmatpush1.msra.mxu0 0.0
          %928 = vmatprep.subr.mxu0 0.0
          %929 = vmatpush1.msra.mxu0 0.0
          %930 = vmatprep.subr.mxu0 0.0
          %931 = vmatpush1.msra.mxu0 0.0
          %932 = vmatprep.subr.mxu0 0.0
          %933 = vmatpush1.msra.mxu0 0.0
          %934 = vmatprep.subr.mxu0 0.0
          %935 = vmatpush1.msra.mxu0 0.0
          %936 = vmatprep.subr.mxu0 0.0
          %937 = vmatpush1.msra.mxu0 0.0
          %938 = vmatprep.subr.mxu0 0.0
          %939 = vmatpush1.msra.mxu0 0.0
          %940 = vmatprep.subr.mxu0 0.0
          %941 = vmatpush1.msra.mxu0 0.0
          %942 = vmatprep.subr.mxu0 0.0
          %943 = vmatpush1.msra.mxu0 0.0
          %944 = vmatprep.subr.mxu0 0.0
          %945 = vmatpush1.msra.mxu0 0.0
          %946 = vmatprep.subr.mxu0 0.0
          %947 = vmatpush1.msra.mxu0 0.0
          %948 = vmatprep.subr.mxu0 0.0
          %949 = vmatpush1.msra.mxu0 0.0
          %950 = vmatprep.subr.mxu0 0.0
          %951 = vmatpush1.msra.mxu0 0.0
          %952 = vmatprep.subr.mxu0 0.0
          %953 = vmatpush1.msra.mxu0 0.0
          %954 = vmatprep.subr.mxu0 0.0
          %955 = vmatpush1.msra.mxu0 0.0
          %956 = vmatprep.subr.mxu0 0.0
          %957 = vmatpush1.msra.mxu0 0.0
          %958 = vmatprep.subr.mxu0 0.0
          %959 = vmatpush1.msra.mxu0 0.0
          %960 = vmatprep.subr.mxu0 0.0
          %961 = vmatpush1.msra.mxu0 0.0
          %962 = vmatprep.subr.mxu0 0.0
          %963 = vmatpush1.msra.mxu0 0.0
          %964 = vmatprep.subr.mxu0 0.0
          %965 = vmatpush1.msra.mxu0 0.0
          %966 = vmatprep.subr.mxu0 0.0
          %967 = vmatpush1.msra.mxu0 0.0
          %968 = vmatprep.subr.mxu0 0.0
          %969 = vmatpush1.msra.mxu0 0.0
          %970 = vmatprep.subr.mxu0 0.0
          %971 = vmatpush1.msra.mxu0 0.0
          %972 = vmatprep.subr.mxu0 0.0
          %973 = vmatpush1.msra.mxu0 0.0
          %974 = vmatprep.subr.mxu0 0.0
          %975 = vmatpush1.msra.mxu0 0.0
          %976 = vmatprep.mubr.f32.mxu0 0.0
          %977 = vmatmul.mubr.f32.gmra.mrb[0].mxu0 %v744
          %v978 = vpop.f32.mrb[0].mxu0
          %v979 = vadd.f32 0.0, %v978
          %v980 = vpop.f32.mrb[0].mxu0
          %981 = vdwg.mxu0
          %982 = vst.msk [vmem:[#allocation3] sm:$0xff] %vm906, %v979
        $region104: #{tpu_custom_call.1} parent=99 // pred_fallthru
          _
        %vm983 = vcmask 261120
        %v984 = vsel %vm983, %v701, 0.0
        %985 = vadd.xlane.f32.xlu0 %v984
        %v986 = vpop.xlane.xlu0 %985
        %v987 = vrcp.pop 32.0
        %v988 = vmul.f32 %v986, %v987
        %v989 = vsub.f32 %v701, %v988
        %v990 = vmul.f32 %v989, %v989
        %v991 = vsel %vm983, %v990, 0.0
        %992 = vadd.xlane.f32.xlu0 %v991
        %v993 = vpop.xlane.xlu0 %992
        %v994 = vmul.f32 %v993, %v987
        %v995 = vadd.f32 %v994, 1e-05
        %v996 = vrsqrt.pop %v995
        %v997 = vmul.f32 %v989, %v996
        %v999 = vlaneseq
        %v1000 = vshrl.u32 %v999, 7
        %v1001 = vsub.s32 0, %v1000
        %v1002 = vrot.slane %v703, %v1001
        %v1004 = vmul.f32 %v997, %v1002
        %v1006 = vlaneseq
        %v1007 = vshrl.u32 %v1006, 7
        %v1008 = vsub.s32 0, %v1007
        %v1009 = vrot.slane %v704, %v1008
        %v1011 = vadd.f32 %v1004, %v1009
        %v1012 = vld [vmem:[%s6] sm:$0xff]
        %v1013 = vld [vmem:[%s6 + $0x8] sm:$0xff]
        %v1014 = vld [vmem:[%s6 + $0x10] sm:$0xff]
        %v1015 = vld [vmem:[%s6 + $0x18] sm:$0xff]
        %v1017 = vsel %vm983, %v1011, 0
        %1019 = vmatprep.subr.mxu0 0.0
        %1020 = vmatpush1.msra.mxu0 %v1012
        %1021 = vmatprep.subr.mxu0 0.0
        %1022 = vmatpush1.msra.mxu0 %v1013
        %1023 = vmatprep.subr.mxu0 0.0
        %1024 = vmatpush1.msra.mxu0 %v1014
        %1025 = vmatprep.subr.mxu0 0.0
        %1026 = vmatpush1.msra.mxu0 %v1015
        %1027 = vmatprep.subr.mxu0 0.0
        %1028 = vmatpush1.msra.mxu0 0.0
        %1029 = vmatprep.subr.mxu0 0.0
        %1030 = vmatpush1.msra.mxu0 0.0
        %1031 = vmatprep.subr.mxu0 0.0
        %1032 = vmatpush1.msra.mxu0 0.0
        %1033 = vmatprep.subr.mxu0 0.0
        %1034 = vmatpush1.msra.mxu0 0.0
        %1035 = vmatprep.subr.mxu0 0.0
        %1036 = vmatpush1.msra.mxu0 0.0
        %1037 = vmatprep.subr.mxu0 0.0
        %1038 = vmatpush1.msra.mxu0 0.0
        %1039 = vmatprep.subr.mxu0 0.0
        %1040 = vmatpush1.msra.mxu0 0.0
        %1041 = vmatprep.subr.mxu0 0.0
        %1042 = vmatpush1.msra.mxu0 0.0
        %1043 = vmatprep.subr.mxu0 0.0
        %1044 = vmatpush1.msra.mxu0 0.0
        %1045 = vmatprep.subr.mxu0 0.0
        %1046 = vmatpush1.msra.mxu0 0.0
        %1047 = vmatprep.subr.mxu0 0.0
        %1048 = vmatpush1.msra.mxu0 0.0
        %1049 = vmatprep.subr.mxu0 0.0
        %1050 = vmatpush1.msra.mxu0 0.0
        %1051 = vmatprep.subr.mxu0 0.0
        %1052 = vmatpush1.msra.mxu0 0.0
        %1053 = vmatprep.subr.mxu0 0.0
        %1054 = vmatpush1.msra.mxu0 0.0
        %1055 = vmatprep.subr.mxu0 0.0
        %1056 = vmatpush1.msra.mxu0 0.0
        %1057 = vmatprep.subr.mxu0 0.0
        %1058 = vmatpush1.msra.mxu0 0.0
        %1059 = vmatprep.subr.mxu0 0.0
        %1060 = vmatpush1.msra.mxu0 0.0
        %1061 = vmatprep.subr.mxu0 0.0
        %1062 = vmatpush1.msra.mxu0 0.0
        %1063 = vmatprep.subr.mxu0 0.0
        %1064 = vmatpush1.msra.mxu0 0.0
        %1065 = vmatprep.subr.mxu0 0.0
        %1066 = vmatpush1.msra.mxu0 0.0
        %1067 = vmatprep.subr.mxu0 0.0
        %1068 = vmatpush1.msra.mxu0 0.0
        %1069 = vmatprep.subr.mxu0 0.0
        %1070 = vmatpush1.msra.mxu0 0.0
        %1071 = vmatprep.subr.mxu0 0.0
        %1072 = vmatpush1.msra.mxu0 0.0
        %1073 = vmatprep.subr.mxu0 0.0
        %1074 = vmatpush1.msra.mxu0 0.0
        %1075 = vmatprep.subr.mxu0 0.0
        %1076 = vmatpush1.msra.mxu0 0.0
        %1077 = vmatprep.subr.mxu0 0.0
        %1078 = vmatpush1.msra.mxu0 0.0
        %1079 = vmatprep.subr.mxu0 0.0
        %1080 = vmatpush1.msra.mxu0 0.0
        %1081 = vmatprep.subr.mxu0 0.0
        %1082 = vmatpush1.msra.mxu0 0.0
        %1083 = vmatprep.mubr.f32.mxu0 0.0
        %1084 = vmatmul.mubr.f32.gmra.mrb[0].mxu0 %v1017
        %v1085 = vpop.f32.mrb[0].mxu0
        %v1086 = vadd.f32 0.0, %v1085
        %v1087 = vpop.f32.mrb[0].mxu0
        %1088 = vdwg.mxu0
        %v1089 = vld [vmem:[%s7] sm:$0xff]
        %v1090 = vld [vmem:[%s7 + $0x8] sm:$0xff]
        %v1091 = vld [vmem:[%s7 + $0x10] sm:$0xff]
        %v1092 = vld [vmem:[%s7 + $0x18] sm:$0xff]
        %1093 = vmatprep.subr.mxu0 0.0
        %1094 = vmatpush1.msra.mxu0 %v1089
        %1095 = vmatprep.subr.mxu0 0.0
        %1096 = vmatpush1.msra.mxu0 %v1090
        %1097 = vmatprep.subr.mxu0 0.0
        %1098 = vmatpush1.msra.mxu0 %v1091
        %1099 = vmatprep.subr.mxu0 0.0
        %1100 = vmatpush1.msra.mxu0 %v1092
        %1101 = vmatprep.subr.mxu0 0.0
        %1102 = vmatpush1.msra.mxu0 0.0
        %1103 = vmatprep.subr.mxu0 0.0
        %1104 = vmatpush1.msra.mxu0 0.0
        %1105 = vmatprep.subr.mxu0 0.0
        %1106 = vmatpush1.msra.mxu0 0.0
        %1107 = vmatprep.subr.mxu0 0.0
        %1108 = vmatpush1.msra.mxu0 0.0
        %1109 = vmatprep.subr.mxu0 0.0
        %1110 = vmatpush1.msra.mxu0 0.0
        %1111 = vmatprep.subr.mxu0 0.0
        %1112 = vmatpush1.msra.mxu0 0.0
        %1113 = vmatprep.subr.mxu0 0.0
        %1114 = vmatpush1.msra.mxu0 0.0
        %1115 = vmatprep.subr.mxu0 0.0
        %1116 = vmatpush1.msra.mxu0 0.0
        %1117 = vmatprep.subr.mxu0 0.0
        %1118 = vmatpush1.msra.mxu0 0.0
        %1119 = vmatprep.subr.mxu0 0.0
        %1120 = vmatpush1.msra.mxu0 0.0
        %1121 = vmatprep.subr.mxu0 0.0
        %1122 = vmatpush1.msra.mxu0 0.0
        %1123 = vmatprep.subr.mxu0 0.0
        %1124 = vmatpush1.msra.mxu0 0.0
        %1125 = vmatprep.subr.mxu0 0.0
        %1126 = vmatpush1.msra.mxu0 0.0
        %1127 = vmatprep.subr.mxu0 0.0
        %1128 = vmatpush1.msra.mxu0 0.0
        %1129 = vmatprep.subr.mxu0 0.0
        %1130 = vmatpush1.msra.mxu0 0.0
        %1131 = vmatprep.subr.mxu0 0.0
        %1132 = vmatpush1.msra.mxu0 0.0
        %1133 = vmatprep.subr.mxu0 0.0
        %1134 = vmatpush1.msra.mxu0 0.0
        %1135 = vmatprep.subr.mxu0 0.0
        %1136 = vmatpush1.msra.mxu0 0.0
        %1137 = vmatprep.subr.mxu0 0.0
        %1138 = vmatpush1.msra.mxu0 0.0
        %1139 = vmatprep.subr.mxu0 0.0
        %1140 = vmatpush1.msra.mxu0 0.0
        %1141 = vmatprep.subr.mxu0 0.0
        %1142 = vmatpush1.msra.mxu0 0.0
        %1143 = vmatprep.subr.mxu0 0.0
        %1144 = vmatpush1.msra.mxu0 0.0
        %1145 = vmatprep.subr.mxu0 0.0
        %1146 = vmatpush1.msra.mxu0 0.0
        %1147 = vmatprep.subr.mxu0 0.0
        %1148 = vmatpush1.msra.mxu0 0.0
        %1149 = vmatprep.subr.mxu0 0.0
        %1150 = vmatpush1.msra.mxu0 0.0
        %1151 = vmatprep.subr.mxu0 0.0
        %1152 = vmatpush1.msra.mxu0 0.0
        %1153 = vmatprep.subr.mxu0 0.0
        %1154 = vmatpush1.msra.mxu0 0.0
        %1155 = vmatprep.subr.mxu0 0.0
        %1156 = vmatpush1.msra.mxu0 0.0
        %1157 = vmatprep.mubr.f32.mxu0 0.0
        %1158 = vmatmul.mubr.f32.gmra.mrb[0].mxu0 %v1017
        %v1159 = vpop.f32.mrb[0].mxu0
        %v1160 = vadd.f32 0.0, %v1159
        %v1161 = vpop.f32.mrb[0].mxu0
        %1162 = vdwg.mxu0
        %v1163 = vld [vmem:[%s696] sm:$0xff]
        %1165 = vrot.lane.b32.xlu0 %v1163, 8
        %v1166 = vpop.permute.xlu0 %1165
        %1168 = vrot.lane.b32.xlu0 %v1163, 16
        %v1169 = vpop.permute.xlu0 %1168
        %1171 = vrot.lane.b32.xlu0 %v1163, 24
        %v1172 = vpop.permute.xlu0 %1171
        %vm1174 = vcmask 64512
        %v1175 = vsel %vm1174, %v1163, %v1166
        %vm1176 = vcmask 130048
        %v1177 = vsel %vm1176, %v1175, %v1169
        %vm1178 = vcmask 195584
        %v1179 = vsel %vm1178, %v1177, %v1172
        %v1180 = vld [vmem:[%s700] sm:$0xff]
        %1182 = vrot.lane.b32.xlu0 %v1180, 8
        %v1183 = vpop.permute.xlu0 %1182
        %1185 = vrot.lane.b32.xlu0 %v1180, 16
        %v1186 = vpop.permute.xlu0 %1185
        %1188 = vrot.lane.b32.xlu0 %v1180, 24
        %v1189 = vpop.permute.xlu0 %1188
        %v1191 = vsel %vm1174, %v1180, %v1183
        %v1192 = vsel %vm1176, %v1191, %v1186
        %v1193 = vsel %vm1178, %v1192, %v1189
        %v1194 = vmul.f32 %v1086, %v1179
        %v1195 = vmul.f32 %v1160, %v1193
        %v1196 = vadd.f32 %v1194, %v1195
        %v1197 = vlaneseq
        %v1198 = vshrl.u32 %v1197, 7
        %v1199 = vstv %s702
        %v1200 = vadd.s32 %v1198, %v1199
        %v1201 = vlaneseq
        %v1202 = vand.u32 %v1201, 127
        %vm1203 = vcmp.ge.s32.totalorder %v1200, %v1202
        %v1204 = vld [vmem:[#allocation2] sm:$0xff]
        %v1205 = vld [vmem:[#allocation3] sm:$0xff]
        %v1207 = vsel %vm1174, %v1196, 0
        %v1210 = vsel %vm1174, %v1204, 0
        %1212 = vmatprep.subr.mxu0 0.0
        %1213 = vmatpush1.xpose.msra.mxu0 %v1210
        %1214 = vmatprep.subr.mxu0 0.0
        %1215 = vmatpush1.xpose.msra.mxu0 0.0
        %1216 = vmatprep.subr.mxu0 0.0
        %1217 = vmatpush1.xpose.msra.mxu0 0.0
        %1218 = vmatprep.subr.mxu0 0.0
        %1219 = vmatpush1.xpose.msra.mxu0 0.0
        %1220 = vmatprep.subr.mxu0 0.0
        %1221 = vmatpush1.xpose.msra.mxu0 0.0
        %1222 = vmatprep.subr.mxu0 0.0
        %1223 = vmatpush1.xpose.msra.mxu0 0.0
        %1224 = vmatprep.subr.mxu0 0.0
        %1225 = vmatpush1.xpose.msra.mxu0 0.0
        %1226 = vmatprep.subr.mxu0 0.0
        %1227 = vmatpush1.xpose.msra.mxu0 0.0
        %1228 = vmatprep.subr.mxu0 0.0
        %1229 = vmatpush1.xpose.msra.mxu0 0.0
        %1230 = vmatprep.subr.mxu0 0.0
        %1231 = vmatpush1.xpose.msra.mxu0 0.0
        %1232 = vmatprep.subr.mxu0 0.0
        %1233 = vmatpush1.xpose.msra.mxu0 0.0
        %1234 = vmatprep.subr.mxu0 0.0
        %1235 = vmatpush1.xpose.msra.mxu0 0.0
        %1236 = vmatprep.subr.mxu0 0.0
        %1237 = vmatpush1.xpose.msra.mxu0 0.0
        %1238 = vmatprep.subr.mxu0 0.0
        %1239 = vmatpush1.xpose.msra.mxu0 0.0
        %1240 = vmatprep.subr.mxu0 0.0
        %1241 = vmatpush1.xpose.msra.mxu0 0.0
        %1242 = vmatprep.subr.mxu0 0.0
        %1243 = vmatpush1.xpose.msra.mxu0 0.0
        %1244 = vmatprep.subr.mxu0 0.0
        %1245 = vmatpush1.xpose.msra.mxu0 0.0
        %1246 = vmatprep.subr.mxu0 0.0
        %1247 = vmatpush1.xpose.msra.mxu0 0.0
        %1248 = vmatprep.subr.mxu0 0.0
        %1249 = vmatpush1.xpose.msra.mxu0 0.0
        %1250 = vmatprep.subr.mxu0 0.0
        %1251 = vmatpush1.xpose.msra.mxu0 0.0
        %1252 = vmatprep.subr.mxu0 0.0
        %1253 = vmatpush1.xpose.msra.mxu0 0.0
        %1254 = vmatprep.subr.mxu0 0.0
        %1255 = vmatpush1.xpose.msra.mxu0 0.0
        %1256 = vmatprep.subr.mxu0 0.0
        %1257 = vmatpush1.xpose.msra.mxu0 0.0
        %1258 = vmatprep.subr.mxu0 0.0
        %1259 = vmatpush1.xpose.msra.mxu0 0.0
        %1260 = vmatprep.subr.mxu0 0.0
        %1261 = vmatpush1.xpose.msra.mxu0 0.0
        %1262 = vmatprep.subr.mxu0 0.0
        %1263 = vmatpush1.xpose.msra.mxu0 0.0
        %1264 = vmatprep.subr.mxu0 0.0
        %1265 = vmatpush1.xpose.msra.mxu0 0.0
        %1266 = vmatprep.subr.mxu0 0.0
        %1267 = vmatpush1.xpose.msra.mxu0 0.0
        %1268 = vmatprep.subr.mxu0 0.0
        %1269 = vmatpush1.xpose.msra.mxu0 0.0
        %1270 = vmatprep.subr.mxu0 0.0
        %1271 = vmatpush1.xpose.msra.mxu0 0.0
        %1272 = vmatprep.subr.mxu0 0.0
        %1273 = vmatpush1.xpose.msra.mxu0 0.0
        %1274 = vmatprep.subr.mxu0 0.0
        %1275 = vmatpush1.xpose.msra.mxu0 0.0
        %1276 = vmatprep.mubr.f32.mxu0 0.0
        %1277 = vmatmul.mubr.f32.gmra.mrb[0].mxu0 %v1207
        %v1278 = vpop.f32.mrb[0].mxu0
        %v1279 = vadd.f32 0.0, %v1278
        %v1280 = vpop.f32.mrb[0].mxu0
        %1281 = vdwg.mxu0
        %v1282 = vmul.f32 %v1279, 0.35355338
        %v1283 = vsel %vm1203, %v1282, -inf
        %v1284 = vsel %vm1174, %v1283, -inf
        %1285 = vmax.xlane.f32.xlu0 %v1284
        %v1286 = vpop.xlane.xlu0 %1285
        %v1287 = vsub.f32 %v1283, %v1286
        %v1288 = vmul.f32 %v1287, 1.442695
        %v1289 = vpow.pop %v1288
        %v1290 = vsel %vm1174, %v1289, 0.0
        %1291 = vadd.xlane.f32.xlu0 %v1290
        %v1292 = vpop.xlane.xlu0 %1291
        %v1293 = vrcp.pop %v1292
        %v1294 = vmul.f32 %v1289, %v1293
        %v1296 = vsel %vm1174, %v1294, 0
        %1298 = vmatprep.subr.mxu0 0.0
        %1299 = vmatpush1.msra.mxu0 %v1205
        %1300 = vmatprep.subr.mxu0 0.0
        %1301 = vmatpush1.msra.mxu0 0.0
        %1302 = vmatprep.subr.mxu0 0.0
        %1303 = vmatpush1.msra.mxu0 0.0
        %1304 = vmatprep.subr.mxu0 0.0
        %1305 = vmatpush1.msra.mxu0 0.0
        %1306 = vmatprep.subr.mxu0 0.0
        %1307 = vmatpush1.msra.mxu0 0.0
        %1308 = vmatprep.subr.mxu0 0.0
        %1309 = vmatpush1.msra.mxu0 0.0
        %1310 = vmatprep.subr.mxu0 0.0
        %1311 = vmatpush1.msra.mxu0 0.0
        %1312 = vmatprep.subr.mxu0 0.0
        %1313 = vmatpush1.msra.mxu0 0.0
        %1314 = vmatprep.subr.mxu0 0.0
        %1315 = vmatpush1.msra.mxu0 0.0
        %1316 = vmatprep.subr.mxu0 0.0
        %1317 = vmatpush1.msra.mxu0 0.0
        %1318 = vmatprep.subr.mxu0 0.0
        %1319 = vmatpush1.msra.mxu0 0.0
        %1320 = vmatprep.subr.mxu0 0.0
        %1321 = vmatpush1.msra.mxu0 0.0
        %1322 = vmatprep.subr.mxu0 0.0
        %1323 = vmatpush1.msra.mxu0 0.0
        %1324 = vmatprep.subr.mxu0 0.0
        %1325 = vmatpush1.msra.mxu0 0.0
        %1326 = vmatprep.subr.mxu0 0.0
        %1327 = vmatpush1.msra.mxu0 0.0
        %1328 = vmatprep.subr.mxu0 0.0
        %1329 = vmatpush1.msra.mxu0 0.0
        %1330 = vmatprep.subr.mxu0 0.0
        %1331 = vmatpush1.msra.mxu0 0.0
        %1332 = vmatprep.subr.mxu0 0.0
        %1333 = vmatpush1.msra.mxu0 0.0
        %1334 = vmatprep.subr.mxu0 0.0
        %1335 = vmatpush1.msra.mxu0 0.0
        %1336 = vmatprep.subr.mxu0 0.0
        %1337 = vmatpush1.msra.mxu0 0.0
        %1338 = vmatprep.subr.mxu0 0.0
        %1339 = vmatpush1.msra.mxu0 0.0
        %1340 = vmatprep.subr.mxu0 0.0
        %1341 = vmatpush1.msra.mxu0 0.0
        %1342 = vmatprep.subr.mxu0 0.0
        %1343 = vmatpush1.msra.mxu0 0.0
        %1344 = vmatprep.subr.mxu0 0.0
        %1345 = vmatpush1.msra.mxu0 0.0
        %1346 = vmatprep.subr.mxu0 0.0
        %1347 = vmatpush1.msra.mxu0 0.0
        %1348 = vmatprep.subr.mxu0 0.0
        %1349 = vmatpush1.msra.mxu0 0.0
        %1350 = vmatprep.subr.mxu0 0.0
        %1351 = vmatpush1.msra.mxu0 0.0
        %1352 = vmatprep.subr.mxu0 0.0
        %1353 = vmatpush1.msra.mxu0 0.0
        %1354 = vmatprep.subr.mxu0 0.0
        %1355 = vmatpush1.msra.mxu0 0.0
        %1356 = vmatprep.subr.mxu0 0.0
        %1357 = vmatpush1.msra.mxu0 0.0
        %1358 = vmatprep.subr.mxu0 0.0
        %1359 = vmatpush1.msra.mxu0 0.0
        %1360 = vmatprep.subr.mxu0 0.0
        %1361 = vmatpush1.msra.mxu0 0.0
        %1362 = vmatprep.mubr.f32.mxu0 0.0
        %1363 = vmatmul.mubr.f32.gmra.mrb[0].mxu0 %v1296
        %v1364 = vpop.f32.mrb[0].mxu0
        %v1365 = vadd.f32 0.0, %v1364
        %v1366 = vpop.f32.mrb[0].mxu0
        %1367 = vdwg.mxu0
        %1368 = vst.msk [vmem:[#allocation4] sm:$0xff] %vm1174, %v1365
        %v1369 = vld [vmem:[#allocation2] sm:$0xff]
        %v1370 = vld [vmem:[#allocation3] sm:$0xff]
        %1371 = vrot.lane.b32.xlu0 %v1196, 120
        %v1372 = vpop.permute.xlu0 %1371
        %v1373 = vsel %vm1174, %v1372, 0
        %v1376 = vsel %vm1174, %v1369, 0
        %1378 = vmatprep.subr.mxu0 0.0
        %1379 = vmatpush1.xpose.msra.mxu0 %v1376
        %1380 = vmatprep.subr.mxu0 0.0
        %1381 = vmatpush1.xpose.msra.mxu0 0.0
        %1382 = vmatprep.subr.mxu0 0.0
        %1383 = vmatpush1.xpose.msra.mxu0 0.0
        %1384 = vmatprep.subr.mxu0 0.0
        %1385 = vmatpush1.xpose.msra.mxu0 0.0
        %1386 = vmatprep.subr.mxu0 0.0
        %1387 = vmatpush1.xpose.msra.mxu0 0.0
        %1388 = vmatprep.subr.mxu0 0.0
        %1389 = vmatpush1.xpose.msra.mxu0 0.0
        %1390 = vmatprep.subr.mxu0 0.0
        %1391 = vmatpush1.xpose.msra.mxu0 0.0
        %1392 = vmatprep.subr.mxu0 0.0
        %1393 = vmatpush1.xpose.msra.mxu0 0.0
        %1394 = vmatprep.subr.mxu0 0.0
        %1395 = vmatpush1.xpose.msra.mxu0 0.0
        %1396 = vmatprep.subr.mxu0 0.0
        %1397 = vmatpush1.xpose.msra.mxu0 0.0
        %1398 = vmatprep.subr.mxu0 0.0
        %1399 = vmatpush1.xpose.msra.mxu0 0.0
        %1400 = vmatprep.subr.mxu0 0.0
        %1401 = vmatpush1.xpose.msra.mxu0 0.0
        %1402 = vmatprep.subr.mxu0 0.0
        %1403 = vmatpush1.xpose.msra.mxu0 0.0
        %1404 = vmatprep.subr.mxu0 0.0
        %1405 = vmatpush1.xpose.msra.mxu0 0.0
        %1406 = vmatprep.subr.mxu0 0.0
        %1407 = vmatpush1.xpose.msra.mxu0 0.0
        %1408 = vmatprep.subr.mxu0 0.0
        %1409 = vmatpush1.xpose.msra.mxu0 0.0
        %1410 = vmatprep.subr.mxu0 0.0
        %1411 = vmatpush1.xpose.msra.mxu0 0.0
        %1412 = vmatprep.subr.mxu0 0.0
        %1413 = vmatpush1.xpose.msra.mxu0 0.0
        %1414 = vmatprep.subr.mxu0 0.0
        %1415 = vmatpush1.xpose.msra.mxu0 0.0
        %1416 = vmatprep.subr.mxu0 0.0
        %1417 = vmatpush1.xpose.msra.mxu0 0.0
        %1418 = vmatprep.subr.mxu0 0.0
        %1419 = vmatpush1.xpose.msra.mxu0 0.0
        %1420 = vmatprep.subr.mxu0 0.0
        %1421 = vmatpush1.xpose.msra.mxu0 0.0
        %1422 = vmatprep.subr.mxu0 0.0
        %1423 = vmatpush1.xpose.msra.mxu0 0.0
        %1424 = vmatprep.subr.mxu0 0.0
        %1425 = vmatpush1.xpose.msra.mxu0 0.0
        %1426 = vmatprep.subr.mxu0 0.0
        %1427 = vmatpush1.xpose.msra.mxu0 0.0
        %1428 = vmatprep.subr.mxu0 0.0
        %1429 = vmatpush1.xpose.msra.mxu0 0.0
        %1430 = vmatprep.subr.mxu0 0.0
        %1431 = vmatpush1.xpose.msra.mxu0 0.0
        %1432 = vmatprep.subr.mxu0 0.0
        %1433 = vmatpush1.xpose.msra.mxu0 0.0
        %1434 = vmatprep.subr.mxu0 0.0
        %1435 = vmatpush1.xpose.msra.mxu0 0.0
        %1436 = vmatprep.subr.mxu0 0.0
        %1437 = vmatpush1.xpose.msra.mxu0 0.0
        %1438 = vmatprep.subr.mxu0 0.0
        %1439 = vmatpush1.xpose.msra.mxu0 0.0
        %1440 = vmatprep.subr.mxu0 0.0
        %1441 = vmatpush1.xpose.msra.mxu0 0.0
        %1442 = vmatprep.mubr.f32.mxu0 0.0
        %1443 = vmatmul.mubr.f32.gmra.mrb[0].mxu0 %v1373
        %v1444 = vpop.f32.mrb[0].mxu0
        %v1445 = vadd.f32 0.0, %v1444
        %v1446 = vpop.f32.mrb[0].mxu0
        %1447 = vdwg.mxu0
        %v1448 = vmul.f32 %v1445, 0.35355338
        %v1449 = vsel %vm1203, %v1448, -inf
        %v1450 = vsel %vm1174, %v1449, -inf
        %1451 = vmax.xlane.f32.xlu0 %v1450
        %v1452 = vpop.xlane.xlu0 %1451
        %v1453 = vsub.f32 %v1449, %v1452
        %v1454 = vmul.f32 %v1453, 1.442695
        %v1455 = vpow.pop %v1454
        %v1456 = vsel %vm1174, %v1455, 0.0
        %1457 = vadd.xlane.f32.xlu0 %v1456
        %v1458 = vpop.xlane.xlu0 %1457
        %v1459 = vrcp.pop %v1458
        %v1460 = vmul.f32 %v1455, %v1459
        %v1462 = vsel %vm1174, %v1460, 0
        %1464 = vmatprep.subr.mxu0 0.0
        %1465 = vmatpush1.msra.mxu0 %v1370
        %1466 = vmatprep.subr.mxu0 0.0
        %1467 = vmatpush1.msra.mxu0 0.0
        %1468 = vmatprep.subr.mxu0 0.0
        %1469 = vmatpush1.msra.mxu0 0.0
        %1470 = vmatprep.subr.mxu0 0.0
        %1471 = vmatpush1.msra.mxu0 0.0
        %1472 = vmatprep.subr.mxu0 0.0
        %1473 = vmatpush1.msra.mxu0 0.0
        %1474 = vmatprep.subr.mxu0 0.0
        %1475 = vmatpush1.msra.mxu0 0.0
        %1476 = vmatprep.subr.mxu0 0.0
        %1477 = vmatpush1.msra.mxu0 0.0
        %1478 = vmatprep.subr.mxu0 0.0
        %1479 = vmatpush1.msra.mxu0 0.0
        %1480 = vmatprep.subr.mxu0 0.0
        %1481 = vmatpush1.msra.mxu0 0.0
        %1482 = vmatprep.subr.mxu0 0.0
        %1483 = vmatpush1.msra.mxu0 0.0
        %1484 = vmatprep.subr.mxu0 0.0
        %1485 = vmatpush1.msra.mxu0 0.0
        %1486 = vmatprep.subr.mxu0 0.0
        %1487 = vmatpush1.msra.mxu0 0.0
        %1488 = vmatprep.subr.mxu0 0.0
        %1489 = vmatpush1.msra.mxu0 0.0
        %1490 = vmatprep.subr.mxu0 0.0
        %1491 = vmatpush1.msra.mxu0 0.0
        %1492 = vmatprep.subr.mxu0 0.0
        %1493 = vmatpush1.msra.mxu0 0.0
        %1494 = vmatprep.subr.mxu0 0.0
        %1495 = vmatpush1.msra.mxu0 0.0
        %1496 = vmatprep.subr.mxu0 0.0
        %1497 = vmatpush1.msra.mxu0 0.0
        %1498 = vmatprep.subr.mxu0 0.0
        %1499 = vmatpush1.msra.mxu0 0.0
        %1500 = vmatprep.subr.mxu0 0.0
        %1501 = vmatpush1.msra.mxu0 0.0
        %1502 = vmatprep.subr.mxu0 0.0
        %1503 = vmatpush1.msra.mxu0 0.0
        %1504 = vmatprep.subr.mxu0 0.0
        %1505 = vmatpush1.msra.mxu0 0.0
        %1506 = vmatprep.subr.mxu0 0.0
        %1507 = vmatpush1.msra.mxu0 0.0
        %1508 = vmatprep.subr.mxu0 0.0
        %1509 = vmatpush1.msra.mxu0 0.0
        %1510 = vmatprep.subr.mxu0 0.0
        %1511 = vmatpush1.msra.mxu0 0.0
        %1512 = vmatprep.subr.mxu0 0.0
        %1513 = vmatpush1.msra.mxu0 0.0
        %1514 = vmatprep.subr.mxu0 0.0
        %1515 = vmatpush1.msra.mxu0 0.0
        %1516 = vmatprep.subr.mxu0 0.0
        %1517 = vmatpush1.msra.mxu0 0.0
        %1518 = vmatprep.subr.mxu0 0.0
        %1519 = vmatpush1.msra.mxu0 0.0
        %1520 = vmatprep.subr.mxu0 0.0
        %1521 = vmatpush1.msra.mxu0 0.0
        %1522 = vmatprep.subr.mxu0 0.0
        %1523 = vmatpush1.msra.mxu0 0.0
        %1524 = vmatprep.subr.mxu0 0.0
        %1525 = vmatpush1.msra.mxu0 0.0
        %1526 = vmatprep.subr.mxu0 0.0
        %1527 = vmatpush1.msra.mxu0 0.0
        %1528 = vmatprep.mubr.f32.mxu0 0.0
        %1529 = vmatmul.mubr.f32.gmra.mrb[0].mxu0 %v1462
        %v1530 = vpop.f32.mrb[0].mxu0
        %v1531 = vadd.f32 0.0, %v1530
        %v1532 = vpop.f32.mrb[0].mxu0
        %1533 = vdwg.mxu0
        %1535 = vrot.lane.b32.xlu0 %v1531, 8
        %v1536 = vpop.permute.xlu0 %1535
        %vm1538 = vcmask 130112
        %1539 = vst.msk [vmem:[#allocation4] sm:$0xff] %vm1538, %v1536
        %v1540 = vld [vmem:[#allocation2] sm:$0xff]
        %v1541 = vld [vmem:[#allocation3] sm:$0xff]
        %1542 = vrot.lane.b32.xlu0 %v1196, 112
        %v1543 = vpop.permute.xlu0 %1542
        %1545 = vrot.lane.b32.xlu0 %v1540, 120
        %v1546 = vpop.permute.xlu0 %1545
        %v1547 = vsel %vm1174, %v1543, 0
        %v1549 = vsel %vm1174, %v1546, 0
        %1551 = vmatprep.subr.mxu0 0.0
        %1552 = vmatpush1.xpose.msra.mxu0 %v1549
        %1553 = vmatprep.subr.mxu0 0.0
        %1554 = vmatpush1.xpose.msra.mxu0 0.0
        %1555 = vmatprep.subr.mxu0 0.0
        %1556 = vmatpush1.xpose.msra.mxu0 0.0
        %1557 = vmatprep.subr.mxu0 0.0
        %1558 = vmatpush1.xpose.msra.mxu0 0.0
        %1559 = vmatprep.subr.mxu0 0.0
        %1560 = vmatpush1.xpose.msra.mxu0 0.0
        %1561 = vmatprep.subr.mxu0 0.0
        %1562 = vmatpush1.xpose.msra.mxu0 0.0
        %1563 = vmatprep.subr.mxu0 0.0
        %1564 = vmatpush1.xpose.msra.mxu0 0.0
        %1565 = vmatprep.subr.mxu0 0.0
        %1566 = vmatpush1.xpose.msra.mxu0 0.0
        %1567 = vmatprep.subr.mxu0 0.0
        %1568 = vmatpush1.xpose.msra.mxu0 0.0
        %1569 = vmatprep.subr.mxu0 0.0
        %1570 = vmatpush1.xpose.msra.mxu0 0.0
        %1571 = vmatprep.subr.mxu0 0.0
        %1572 = vmatpush1.xpose.msra.mxu0 0.0
        %1573 = vmatprep.subr.mxu0 0.0
        %1574 = vmatpush1.xpose.msra.mxu0 0.0
        %1575 = vmatprep.subr.mxu0 0.0
        %1576 = vmatpush1.xpose.msra.mxu0 0.0
        %1577 = vmatprep.subr.mxu0 0.0
        %1578 = vmatpush1.xpose.msra.mxu0 0.0
        %1579 = vmatprep.subr.mxu0 0.0
        %1580 = vmatpush1.xpose.msra.mxu0 0.0
        %1581 = vmatprep.subr.mxu0 0.0
        %1582 = vmatpush1.xpose.msra.mxu0 0.0
        %1583 = vmatprep.subr.mxu0 0.0
        %1584 = vmatpush1.xpose.msra.mxu0 0.0
        %1585 = vmatprep.subr.mxu0 0.0
        %1586 = vmatpush1.xpose.msra.mxu0 0.0
        %1587 = vmatprep.subr.mxu0 0.0
        %1588 = vmatpush1.xpose.msra.mxu0 0.0
        %1589 = vmatprep.subr.mxu0 0.0
        %1590 = vmatpush1.xpose.msra.mxu0 0.0
        %1591 = vmatprep.subr.mxu0 0.0
        %1592 = vmatpush1.xpose.msra.mxu0 0.0
        %1593 = vmatprep.subr.mxu0 0.0
        %1594 = vmatpush1.xpose.msra.mxu0 0.0
        %1595 = vmatprep.subr.mxu0 0.0
        %1596 = vmatpush1.xpose.msra.mxu0 0.0
        %1597 = vmatprep.subr.mxu0 0.0
        %1598 = vmatpush1.xpose.msra.mxu0 0.0
        %1599 = vmatprep.subr.mxu0 0.0
        %1600 = vmatpush1.xpose.msra.mxu0 0.0
        %1601 = vmatprep.subr.mxu0 0.0
        %1602 = vmatpush1.xpose.msra.mxu0 0.0
        %1603 = vmatprep.subr.mxu0 0.0
        %1604 = vmatpush1.xpose.msra.mxu0 0.0
        %1605 = vmatprep.subr.mxu0 0.0
        %1606 = vmatpush1.xpose.msra.mxu0 0.0
        %1607 = vmatprep.subr.mxu0 0.0
        %1608 = vmatpush1.xpose.msra.mxu0 0.0
        %1609 = vmatprep.subr.mxu0 0.0
        %1610 = vmatpush1.xpose.msra.mxu0 0.0
        %1611 = vmatprep.subr.mxu0 0.0
        %1612 = vmatpush1.xpose.msra.mxu0 0.0
        %1613 = vmatprep.subr.mxu0 0.0
        %1614 = vmatpush1.xpose.msra.mxu0 0.0
        %1615 = vmatprep.mubr.f32.mxu0 0.0
        %1616 = vmatmul.mubr.f32.gmra.mrb[0].mxu0 %v1547
        %v1617 = vpop.f32.mrb[0].mxu0
        %v1618 = vadd.f32 0.0, %v1617
        %v1619 = vpop.f32.mrb[0].mxu0
        %1620 = vdwg.mxu0
        %v1621 = vmul.f32 %v1618, 0.35355338
        %v1622 = vsel %vm1203, %v1621, -inf
        %v1623 = vsel %vm1174, %v1622, -inf
        %1624 = vmax.xlane.f32.xlu0 %v1623
        %v1625 = vpop.xlane.xlu0 %1624
        %v1626 = vsub.f32 %v1622, %v1625
        %v1627 = vmul.f32 %v1626, 1.442695
        %v1628 = vpow.pop %v1627
        %v1629 = vsel %vm1174, %v1628, 0.0
        %1630 = vadd.xlane.f32.xlu0 %v1629
        %v1631 = vpop.xlane.xlu0 %1630
        %v1632 = vrcp.pop %v1631
        %v1633 = vmul.f32 %v1628, %v1632
        %1635 = vrot.lane.b32.xlu0 %v1541, 120
        %v1636 = vpop.permute.xlu0 %1635
        %v1639 = vsel %vm1174, %v1633, 0
        %1641 = vmatprep.subr.mxu0 0.0
        %1642 = vmatpush1.msra.mxu0 %v1636
        %1643 = vmatprep.subr.mxu0 0.0
        %1644 = vmatpush1.msra.mxu0 0.0
        %1645 = vmatprep.subr.mxu0 0.0
        %1646 = vmatpush1.msra.mxu0 0.0
        %1647 = vmatprep.subr.mxu0 0.0
        %1648 = vmatpush1.msra.mxu0 0.0
        %1649 = vmatprep.subr.mxu0 0.0
        %1650 = vmatpush1.msra.mxu0 0.0
        %1651 = vmatprep.subr.mxu0 0.0
        %1652 = vmatpush1.msra.mxu0 0.0
        %1653 = vmatprep.subr.mxu0 0.0
        %1654 = vmatpush1.msra.mxu0 0.0
        %1655 = vmatprep.subr.mxu0 0.0
        %1656 = vmatpush1.msra.mxu0 0.0
        %1657 = vmatprep.subr.mxu0 0.0
        %1658 = vmatpush1.msra.mxu0 0.0
        %1659 = vmatprep.subr.mxu0 0.0
        %1660 = vmatpush1.msra.mxu0 0.0
        %1661 = vmatprep.subr.mxu0 0.0
        %1662 = vmatpush1.msra.mxu0 0.0
        %1663 = vmatprep.subr.mxu0 0.0
        %1664 = vmatpush1.msra.mxu0 0.0
        %1665 = vmatprep.subr.mxu0 0.0
        %1666 = vmatpush1.msra.mxu0 0.0
        %1667 = vmatprep.subr.mxu0 0.0
        %1668 = vmatpush1.msra.mxu0 0.0
        %1669 = vmatprep.subr.mxu0 0.0
        %1670 = vmatpush1.msra.mxu0 0.0
        %1671 = vmatprep.subr.mxu0 0.0
        %1672 = vmatpush1.msra.mxu0 0.0
        %1673 = vmatprep.subr.mxu0 0.0
        %1674 = vmatpush1.msra.mxu0 0.0
        %1675 = vmatprep.subr.mxu0 0.0
        %1676 = vmatpush1.msra.mxu0 0.0
        %1677 = vmatprep.subr.mxu0 0.0
        %1678 = vmatpush1.msra.mxu0 0.0
        %1679 = vmatprep.subr.mxu0 0.0
        %1680 = vmatpush1.msra.mxu0 0.0
        %1681 = vmatprep.subr.mxu0 0.0
        %1682 = vmatpush1.msra.mxu0 0.0
        %1683 = vmatprep.subr.mxu0 0.0
        %1684 = vmatpush1.msra.mxu0 0.0
        %1685 = vmatprep.subr.mxu0 0.0
        %1686 = vmatpush1.msra.mxu0 0.0
        %1687 = vmatprep.subr.mxu0 0.0
        %1688 = vmatpush1.msra.mxu0 0.0
        %1689 = vmatprep.subr.mxu0 0.0
        %1690 = vmatpush1.msra.mxu0 0.0
        %1691 = vmatprep.subr.mxu0 0.0
        %1692 = vmatpush1.msra.mxu0 0.0
        %1693 = vmatprep.subr.mxu0 0.0
        %1694 = vmatpush1.msra.mxu0 0.0
        %1695 = vmatprep.subr.mxu0 0.0
        %1696 = vmatpush1.msra.mxu0 0.0
        %1697 = vmatprep.subr.mxu0 0.0
        %1698 = vmatpush1.msra.mxu0 0.0
        %1699 = vmatprep.subr.mxu0 0.0
        %1700 = vmatpush1.msra.mxu0 0.0
        %1701 = vmatprep.subr.mxu0 0.0
        %1702 = vmatpush1.msra.mxu0 0.0
        %1703 = vmatprep.subr.mxu0 0.0
        %1704 = vmatpush1.msra.mxu0 0.0
        %1705 = vmatprep.mubr.f32.mxu0 0.0
        %1706 = vmatmul.mubr.f32.gmra.mrb[0].mxu0 %v1639
        %v1707 = vpop.f32.mrb[0].mxu0
        %v1708 = vadd.f32 0.0, %v1707
        %v1709 = vpop.f32.mrb[0].mxu0
        %1710 = vdwg.mxu0
        %1712 = vrot.lane.b32.xlu0 %v1708, 16
        %v1713 = vpop.permute.xlu0 %1712
        %vm1715 = vcmask 195712
        %1716 = vst.msk [vmem:[#allocation4] sm:$0xff] %vm1715, %v1713
        %v1717 = vld [vmem:[#allocation2] sm:$0xff]
        %v1718 = vld [vmem:[#allocation3] sm:$0xff]
        %1719 = vrot.lane.b32.xlu0 %v1196, 104
        %v1720 = vpop.permute.xlu0 %1719
        %1722 = vrot.lane.b32.xlu0 %v1717, 120
        %v1723 = vpop.permute.xlu0 %1722
        %v1724 = vsel %vm1174, %v1720, 0
        %v1726 = vsel %vm1174, %v1723, 0
        %1728 = vmatprep.subr.mxu0 0.0
        %1729 = vmatpush1.xpose.msra.mxu0 %v1726
        %1730 = vmatprep.subr.mxu0 0.0
        %1731 = vmatpush1.xpose.msra.mxu0 0.0
        %1732 = vmatprep.subr.mxu0 0.0
        %1733 = vmatpush1.xpose.msra.mxu0 0.0
        %1734 = vmatprep.subr.mxu0 0.0
        %1735 = vmatpush1.xpose.msra.mxu0 0.0
        %1736 = vmatprep.subr.mxu0 0.0
        %1737 = vmatpush1.xpose.msra.mxu0 0.0
        %1738 = vmatprep.subr.mxu0 0.0
        %1739 = vmatpush1.xpose.msra.mxu0 0.0
        %1740 = vmatprep.subr.mxu0 0.0
        %1741 = vmatpush1.xpose.msra.mxu0 0.0
        %1742 = vmatprep.subr.mxu0 0.0
        %1743 = vmatpush1.xpose.msra.mxu0 0.0
        %1744 = vmatprep.subr.mxu0 0.0
        %1745 = vmatpush1.xpose.msra.mxu0 0.0
        %1746 = vmatprep.subr.mxu0 0.0
        %1747 = vmatpush1.xpose.msra.mxu0 0.0
        %1748 = vmatprep.subr.mxu0 0.0
        %1749 = vmatpush1.xpose.msra.mxu0 0.0
        %1750 = vmatprep.subr.mxu0 0.0
        %1751 = vmatpush1.xpose.msra.mxu0 0.0
        %1752 = vmatprep.subr.mxu0 0.0
        %1753 = vmatpush1.xpose.msra.mxu0 0.0
        %1754 = vmatprep.subr.mxu0 0.0
        %1755 = vmatpush1.xpose.msra.mxu0 0.0
        %1756 = vmatprep.subr.mxu0 0.0
        %1757 = vmatpush1.xpose.msra.mxu0 0.0
        %1758 = vmatprep.subr.mxu0 0.0
        %1759 = vmatpush1.xpose.msra.mxu0 0.0
        %1760 = vmatprep.subr.mxu0 0.0
        %1761 = vmatpush1.xpose.msra.mxu0 0.0
        %1762 = vmatprep.subr.mxu0 0.0
        %1763 = vmatpush1.xpose.msra.mxu0 0.0
        %1764 = vmatprep.subr.mxu0 0.0
        %1765 = vmatpush1.xpose.msra.mxu0 0.0
        %1766 = vmatprep.subr.mxu0 0.0
        %1767 = vmatpush1.xpose.msra.mxu0 0.0
        %1768 = vmatprep.subr.mxu0 0.0
        %1769 = vmatpush1.xpose.msra.mxu0 0.0
        %1770 = vmatprep.subr.mxu0 0.0
        %1771 = vmatpush1.xpose.msra.mxu0 0.0
        %1772 = vmatprep.subr.mxu0 0.0
        %1773 = vmatpush1.xpose.msra.mxu0 0.0
        %1774 = vmatprep.subr.mxu0 0.0
        %1775 = vmatpush1.xpose.msra.mxu0 0.0
        %1776 = vmatprep.subr.mxu0 0.0
        %1777 = vmatpush1.xpose.msra.mxu0 0.0
        %1778 = vmatprep.subr.mxu0 0.0
        %1779 = vmatpush1.xpose.msra.mxu0 0.0
        %1780 = vmatprep.subr.mxu0 0.0
        %1781 = vmatpush1.xpose.msra.mxu0 0.0
        %1782 = vmatprep.subr.mxu0 0.0
        %1783 = vmatpush1.xpose.msra.mxu0 0.0
        %1784 = vmatprep.subr.mxu0 0.0
        %1785 = vmatpush1.xpose.msra.mxu0 0.0
        %1786 = vmatprep.subr.mxu0 0.0
        %1787 = vmatpush1.xpose.msra.mxu0 0.0
        %1788 = vmatprep.subr.mxu0 0.0
        %1789 = vmatpush1.xpose.msra.mxu0 0.0
        %1790 = vmatprep.subr.mxu0 0.0
        %1791 = vmatpush1.xpose.msra.mxu0 0.0
        %1792 = vmatprep.mubr.f32.mxu0 0.0
        %1793 = vmatmul.mubr.f32.gmra.mrb[0].mxu0 %v1724
        %v1794 = vpop.f32.mrb[0].mxu0
        %v1795 = vadd.f32 0.0, %v1794
        %v1796 = vpop.f32.mrb[0].mxu0
        %1797 = vdwg.mxu0
        %v1798 = vmul.f32 %v1795, 0.35355338
        %v1799 = vsel %vm1203, %v1798, -inf
        %v1800 = vsel %vm1174, %v1799, -inf
        %1801 = vmax.xlane.f32.xlu0 %v1800
        %v1802 = vpop.xlane.xlu0 %1801
        %v1803 = vsub.f32 %v1799, %v1802
        %v1804 = vmul.f32 %v1803, 1.442695
        %v1805 = vpow.pop %v1804
        %v1806 = vsel %vm1174, %v1805, 0.0
        %1807 = vadd.xlane.f32.xlu0 %v1806
        %v1808 = vpop.xlane.xlu0 %1807
        %v1809 = vrcp.pop %v1808
        %v1810 = vmul.f32 %v1805, %v1809
        %1812 = vrot.lane.b32.xlu0 %v1718, 120
        %v1813 = vpop.permute.xlu0 %1812
        %v1816 = vsel %vm1174, %v1810, 0
        %1818 = vmatprep.subr.mxu0 0.0
        %1819 = vmatpush1.msra.mxu0 %v1813
        %1820 = vmatprep.subr.mxu0 0.0
        %1821 = vmatpush1.msra.mxu0 0.0
        %1822 = vmatprep.subr.mxu0 0.0
        %1823 = vmatpush1.msra.mxu0 0.0
        %1824 = vmatprep.subr.mxu0 0.0
        %1825 = vmatpush1.msra.mxu0 0.0
        %1826 = vmatprep.subr.mxu0 0.0
        %1827 = vmatpush1.msra.mxu0 0.0
        %1828 = vmatprep.subr.mxu0 0.0
        %1829 = vmatpush1.msra.mxu0 0.0
        %1830 = vmatprep.subr.mxu0 0.0
        %1831 = vmatpush1.msra.mxu0 0.0
        %1832 = vmatprep.subr.mxu0 0.0
        %1833 = vmatpush1.msra.mxu0 0.0
        %1834 = vmatprep.subr.mxu0 0.0
        %1835 = vmatpush1.msra.mxu0 0.0
        %1836 = vmatprep.subr.mxu0 0.0
        %1837 = vmatpush1.msra.mxu0 0.0
        %1838 = vmatprep.subr.mxu0 0.0
        %1839 = vmatpush1.msra.mxu0 0.0
        %1840 = vmatprep.subr.mxu0 0.0
        %1841 = vmatpush1.msra.mxu0 0.0
        %1842 = vmatprep.subr.mxu0 0.0
        %1843 = vmatpush1.msra.mxu0 0.0
        %1844 = vmatprep.subr.mxu0 0.0
        %1845 = vmatpush1.msra.mxu0 0.0
        %1846 = vmatprep.subr.mxu0 0.0
        %1847 = vmatpush1.msra.mxu0 0.0
        %1848 = vmatprep.subr.mxu0 0.0
        %1849 = vmatpush1.msra.mxu0 0.0
        %1850 = vmatprep.subr.mxu0 0.0
        %1851 = vmatpush1.msra.mxu0 0.0
        %1852 = vmatprep.subr.mxu0 0.0
        %1853 = vmatpush1.msra.mxu0 0.0
        %1854 = vmatprep.subr.mxu0 0.0
        %1855 = vmatpush1.msra.mxu0 0.0
        %1856 = vmatprep.subr.mxu0 0.0
        %1857 = vmatpush1.msra.mxu0 0.0
        %1858 = vmatprep.subr.mxu0 0.0
        %1859 = vmatpush1.msra.mxu0 0.0
        %1860 = vmatprep.subr.mxu0 0.0
        %1861 = vmatpush1.msra.mxu0 0.0
        %1862 = vmatprep.subr.mxu0 0.0
        %1863 = vmatpush1.msra.mxu0 0.0
        %1864 = vmatprep.subr.mxu0 0.0
        %1865 = vmatpush1.msra.mxu0 0.0
        %1866 = vmatprep.subr.mxu0 0.0
        %1867 = vmatpush1.msra.mxu0 0.0
        %1868 = vmatprep.subr.mxu0 0.0
        %1869 = vmatpush1.msra.mxu0 0.0
        %1870 = vmatprep.subr.mxu0 0.0
        %1871 = vmatpush1.msra.mxu0 0.0
        %1872 = vmatprep.subr.mxu0 0.0
        %1873 = vmatpush1.msra.mxu0 0.0
        %1874 = vmatprep.subr.mxu0 0.0
        %1875 = vmatpush1.msra.mxu0 0.0
        %1876 = vmatprep.subr.mxu0 0.0
        %1877 = vmatpush1.msra.mxu0 0.0
        %1878 = vmatprep.subr.mxu0 0.0
        %1879 = vmatpush1.msra.mxu0 0.0
        %1880 = vmatprep.subr.mxu0 0.0
        %1881 = vmatpush1.msra.mxu0 0.0
        %1882 = vmatprep.mubr.f32.mxu0 0.0
        %1883 = vmatmul.mubr.f32.gmra.mrb[0].mxu0 %v1816
        %v1884 = vpop.f32.mrb[0].mxu0
        %v1885 = vadd.f32 0.0, %v1884
        %v1886 = vpop.f32.mrb[0].mxu0
        %1887 = vdwg.mxu0
        %1889 = vrot.lane.b32.xlu0 %v1885, 24
        %v1890 = vpop.permute.xlu0 %1889
        %vm1892 = vcmask 261312
        %1893 = vst.msk [vmem:[#allocation4] sm:$0xff] %vm1892, %v1890
        %v1894 = vld [vmem:[#allocation4] sm:$0xff]
        %v1895 = vld [vmem:[%s11] sm:$0xff]
        %v1896 = vld [vmem:[%s11 + $0x8] sm:$0xff]
        %v1897 = vld [vmem:[%s11 + $0x10] sm:$0xff]
        %v1898 = vld [vmem:[%s11 + $0x18] sm:$0xff]
        %v1900 = vsel %vm983, %v1894, 0
        %1902 = vmatprep.subr.mxu0 0.0
        %1903 = vmatpush1.msra.mxu0 %v1895
        %1904 = vmatprep.subr.mxu0 0.0
        %1905 = vmatpush1.msra.mxu0 %v1896
        %1906 = vmatprep.subr.mxu0 0.0
        %1907 = vmatpush1.msra.mxu0 %v1897
        %1908 = vmatprep.subr.mxu0 0.0
        %1909 = vmatpush1.msra.mxu0 %v1898
        %1910 = vmatprep.subr.mxu0 0.0
        %1911 = vmatpush1.msra.mxu0 0.0
        %1912 = vmatprep.subr.mxu0 0.0
        %1913 = vmatpush1.msra.mxu0 0.0
        %1914 = vmatprep.subr.mxu0 0.0
        %1915 = vmatpush1.msra.mxu0 0.0
        %1916 = vmatprep.subr.mxu0 0.0
        %1917 = vmatpush1.msra.mxu0 0.0
        %1918 = vmatprep.subr.mxu0 0.0
        %1919 = vmatpush1.msra.mxu0 0.0
        %1920 = vmatprep.subr.mxu0 0.0
        %1921 = vmatpush1.msra.mxu0 0.0
        %1922 = vmatprep.subr.mxu0 0.0
        %1923 = vmatpush1.msra.mxu0 0.0
        %1924 = vmatprep.subr.mxu0 0.0
        %1925 = vmatpush1.msra.mxu0 0.0
        %1926 = vmatprep.subr.mxu0 0.0
        %1927 = vmatpush1.msra.mxu0 0.0
        %1928 = vmatprep.subr.mxu0 0.0
        %1929 = vmatpush1.msra.mxu0 0.0
        %1930 = vmatprep.subr.mxu0 0.0
        %1931 = vmatpush1.msra.mxu0 0.0
        %1932 = vmatprep.subr.mxu0 0.0
        %1933 = vmatpush1.msra.mxu0 0.0
        %1934 = vmatprep.subr.mxu0 0.0
        %1935 = vmatpush1.msra.mxu0 0.0
        %1936 = vmatprep.subr.mxu0 0.0
        %1937 = vmatpush1.msra.mxu0 0.0
        %1938 = vmatprep.subr.mxu0 0.0
        %1939 = vmatpush1.msra.mxu0 0.0
        %1940 = vmatprep.subr.mxu0 0.0
        %1941 = vmatpush1.msra.mxu0 0.0
        %1942 = vmatprep.subr.mxu0 0.0
        %1943 = vmatpush1.msra.mxu0 0.0
        %1944 = vmatprep.subr.mxu0 0.0
        %1945 = vmatpush1.msra.mxu0 0.0
        %1946 = vmatprep.subr.mxu0 0.0
        %1947 = vmatpush1.msra.mxu0 0.0
        %1948 = vmatprep.subr.mxu0 0.0
        %1949 = vmatpush1.msra.mxu0 0.0
        %1950 = vmatprep.subr.mxu0 0.0
        %1951 = vmatpush1.msra.mxu0 0.0
        %1952 = vmatprep.subr.mxu0 0.0
        %1953 = vmatpush1.msra.mxu0 0.0
        %1954 = vmatprep.subr.mxu0 0.0
        %1955 = vmatpush1.msra.mxu0 0.0
        %1956 = vmatprep.subr.mxu0 0.0
        %1957 = vmatpush1.msra.mxu0 0.0
        %1958 = vmatprep.subr.mxu0 0.0
        %1959 = vmatpush1.msra.mxu0 0.0
        %1960 = vmatprep.subr.mxu0 0.0
        %1961 = vmatpush1.msra.mxu0 0.0
        %1962 = vmatprep.subr.mxu0 0.0
        %1963 = vmatpush1.msra.mxu0 0.0
        %1964 = vmatprep.subr.mxu0 0.0
        %1965 = vmatpush1.msra.mxu0 0.0
        %1966 = vmatprep.mubr.f32.mxu0 0.0
        %1967 = vmatmul.mubr.f32.gmra.mrb[0].mxu0 %v1900
        %v1968 = vpop.f32.mrb[0].mxu0
        %v1969 = vadd.f32 0.0, %v1968
        %v1970 = vpop.f32.mrb[0].mxu0
        %1971 = vdwg.mxu0
        %v1972 = vadd.f32 %v701, %v1969
        %v1973 = vld [vmem:[%s18] sm:$0x1]
        %v1974 = vld [vmem:[%s19] sm:$0x1]
        %v1975 = vsel %vm983, %v1972, 0.0
        %1976 = vadd.xlane.f32.xlu0 %v1975
        %v1977 = vpop.xlane.xlu0 %1976
        %v1978 = vmul.f32 %v1977, %v987
        %v1979 = vsub.f32 %v1972, %v1978
        %v1980 = vmul.f32 %v1979, %v1979
        %v1981 = vsel %vm983, %v1980, 0.0
        %1982 = vadd.xlane.f32.xlu0 %v1981
        %v1983 = vpop.xlane.xlu0 %1982
        %v1984 = vmul.f32 %v1983, %v987
        %v1985 = vadd.f32 %v1984, 1e-05
        %v1986 = vrsqrt.pop %v1985
        %v1987 = vmul.f32 %v1979, %v1986
        %v1989 = vlaneseq
        %v1990 = vshrl.u32 %v1989, 7
        %v1991 = vsub.s32 0, %v1990
        %v1992 = vrot.slane %v1973, %v1991
        %v1994 = vmul.f32 %v1987, %v1992
        %v1996 = vlaneseq
        %v1997 = vshrl.u32 %v1996, 7
        %v1998 = vsub.s32 0, %v1997
        %v1999 = vrot.slane %v1974, %v1998
        %v2001 = vadd.f32 %v1994, %v1999
        %v2002 = vld [vmem:[%s12] sm:$0xff]
        %v2003 = vld [vmem:[%s12 + $0x8] sm:$0xff]
        %v2004 = vld [vmem:[%s12 + $0x10] sm:$0xff]
        %v2005 = vld [vmem:[%s12 + $0x18] sm:$0xff]
        %v2006 = vld [vmem:[%s13] sm:$0x1]
        %v2008 = vlaneseq
        %v2009 = vshrl.u32 %v2008, 7
        %v2010 = vsub.s32 0, %v2009
        %v2011 = vrot.slane %v2006, %v2010
        %v2014 = vsel %vm983, %v2001, 0
        %2016 = vmatprep.subr.mxu0 0.0
        %2017 = vmatpush1.msra.mxu0 %v2002
        %2018 = vmatprep.subr.mxu0 0.0
        %2019 = vmatpush1.msra.mxu0 %v2003
        %2020 = vmatprep.subr.mxu0 0.0
        %2021 = vmatpush1.msra.mxu0 %v2004
        %2022 = vmatprep.subr.mxu0 0.0
        %2023 = vmatpush1.msra.mxu0 %v2005
        %2024 = vmatprep.subr.mxu0 0.0
        %2025 = vmatpush1.msra.mxu0 0.0
        %2026 = vmatprep.subr.mxu0 0.0
        %2027 = vmatpush1.msra.mxu0 0.0
        %2028 = vmatprep.subr.mxu0 0.0
        %2029 = vmatpush1.msra.mxu0 0.0
        %2030 = vmatprep.subr.mxu0 0.0
        %2031 = vmatpush1.msra.mxu0 0.0
        %2032 = vmatprep.subr.mxu0 0.0
        %2033 = vmatpush1.msra.mxu0 0.0
        %2034 = vmatprep.subr.mxu0 0.0
        %2035 = vmatpush1.msra.mxu0 0.0
        %2036 = vmatprep.subr.mxu0 0.0
        %2037 = vmatpush1.msra.mxu0 0.0
        %2038 = vmatprep.subr.mxu0 0.0
        %2039 = vmatpush1.msra.mxu0 0.0
        %2040 = vmatprep.subr.mxu0 0.0
        %2041 = vmatpush1.msra.mxu0 0.0
        %2042 = vmatprep.subr.mxu0 0.0
        %2043 = vmatpush1.msra.mxu0 0.0
        %2044 = vmatprep.subr.mxu0 0.0
        %2045 = vmatpush1.msra.mxu0 0.0
        %2046 = vmatprep.subr.mxu0 0.0
        %2047 = vmatpush1.msra.mxu0 0.0
        %2048 = vmatprep.subr.mxu0 0.0
        %2049 = vmatpush1.msra.mxu0 0.0
        %2050 = vmatprep.subr.mxu0 0.0
        %2051 = vmatpush1.msra.mxu0 0.0
        %2052 = vmatprep.subr.mxu0 0.0
        %2053 = vmatpush1.msra.mxu0 0.0
        %2054 = vmatprep.subr.mxu0 0.0
        %2055 = vmatpush1.msra.mxu0 0.0
        %2056 = vmatprep.subr.mxu0 0.0
        %2057 = vmatpush1.msra.mxu0 0.0
        %2058 = vmatprep.subr.mxu0 0.0
        %2059 = vmatpush1.msra.mxu0 0.0
        %2060 = vmatprep.subr.mxu0 0.0
        %2061 = vmatpush1.msra.mxu0 0.0
        %2062 = vmatprep.subr.mxu0 0.0
        %2063 = vmatpush1.msra.mxu0 0.0
        %2064 = vmatprep.subr.mxu0 0.0
        %2065 = vmatpush1.msra.mxu0 0.0
        %2066 = vmatprep.subr.mxu0 0.0
        %2067 = vmatpush1.msra.mxu0 0.0
        %2068 = vmatprep.subr.mxu0 0.0
        %2069 = vmatpush1.msra.mxu0 0.0
        %2070 = vmatprep.subr.mxu0 0.0
        %2071 = vmatpush1.msra.mxu0 0.0
        %2072 = vmatprep.subr.mxu0 0.0
        %2073 = vmatpush1.msra.mxu0 0.0
        %2074 = vmatprep.subr.mxu0 0.0
        %2075 = vmatpush1.msra.mxu0 0.0
        %2076 = vmatprep.subr.mxu0 0.0
        %2077 = vmatpush1.msra.mxu0 0.0
        %2078 = vmatprep.subr.mxu0 0.0
        %2079 = vmatpush1.msra.mxu0 0.0
        %2080 = vmatprep.mubr.f32.mxu0 0.0
        %2081 = vmatmul.mubr.f32.gmra.mrb[0].mxu0 %v2014
        %v2082 = vpop.f32.mrb[0].mxu0
        %v2083 = vadd.f32 %v2011, %v2082
        %v2084 = vpop.f32.mrb[0].mxu0
        %2085 = vdwg.mxu0
        %v2086 = vmul.f32 %v2083, 0.5
        %v2087 = vmul.f32 %v2083, 0.70710677
        %v2088 = verf.f32.pop %v2087
        %v2089 = vadd.f32 %v2088, 1.0
        %v2090 = vmul.f32 %v2086, %v2089
        %v2091 = vld [vmem:[%s14] sm:$0xff]
        %v2092 = vld [vmem:[%s14 + $0x8] sm:$0xff]
        %v2093 = vld [vmem:[%s14 + $0x10] sm:$0xff]
        %v2094 = vld [vmem:[%s14 + $0x18] sm:$0xff]
        %v2095 = vld [vmem:[%s14 + $0x20] sm:$0xff]
        %v2096 = vld [vmem:[%s14 + $0x28] sm:$0xff]
        %v2097 = vld [vmem:[%s14 + $0x30] sm:$0xff]
        %v2098 = vld [vmem:[%s14 + $0x38] sm:$0xff]
        %v2099 = vld [vmem:[%s14 + $0x40] sm:$0xff]
        %v2100 = vld [vmem:[%s14 + $0x48] sm:$0xff]
        %v2101 = vld [vmem:[%s14 + $0x50] sm:$0xff]
        %v2102 = vld [vmem:[%s14 + $0x58] sm:$0xff]
        %v2103 = vld [vmem:[%s14 + $0x60] sm:$0xff]
        %v2104 = vld [vmem:[%s14 + $0x68] sm:$0xff]
        %v2105 = vld [vmem:[%s14 + $0x70] sm:$0xff]
        %v2106 = vld [vmem:[%s14 + $0x78] sm:$0xff]
        %v2107 = vld [vmem:[%s15] sm:$0x1]
        %v2109 = vlaneseq
        %v2110 = vshrl.u32 %v2109, 7
        %v2111 = vsub.s32 0, %v2110
        %v2112 = vrot.slane %v2107, %v2111
        %2114 = vmatprep.subr.mxu0 0.0
        %2115 = vmatpush1.msra.mxu0 %v2091
        %2116 = vmatprep.subr.mxu0 0.0
        %2117 = vmatpush1.msra.mxu0 %v2092
        %2118 = vmatprep.subr.mxu0 0.0
        %2119 = vmatpush1.msra.mxu0 %v2093
        %2120 = vmatprep.subr.mxu0 0.0
        %2121 = vmatpush1.msra.mxu0 %v2094
        %2122 = vmatprep.subr.mxu0 0.0
        %2123 = vmatpush1.msra.mxu0 %v2095
        %2124 = vmatprep.subr.mxu0 0.0
        %2125 = vmatpush1.msra.mxu0 %v2096
        %2126 = vmatprep.subr.mxu0 0.0
        %2127 = vmatpush1.msra.mxu0 %v2097
        %2128 = vmatprep.subr.mxu0 0.0
        %2129 = vmatpush1.msra.mxu0 %v2098
        %2130 = vmatprep.subr.mxu0 0.0
        %2131 = vmatpush1.msra.mxu0 %v2099
        %2132 = vmatprep.subr.mxu0 0.0
        %2133 = vmatpush1.msra.mxu0 %v2100
        %2134 = vmatprep.subr.mxu0 0.0
        %2135 = vmatpush1.msra.mxu0 %v2101
        %2136 = vmatprep.subr.mxu0 0.0
        %2137 = vmatpush1.msra.mxu0 %v2102
        %2138 = vmatprep.subr.mxu0 0.0
        %2139 = vmatpush1.msra.mxu0 %v2103
        %2140 = vmatprep.subr.mxu0 0.0
        %2141 = vmatpush1.msra.mxu0 %v2104
        %2142 = vmatprep.subr.mxu0 0.0
        %2143 = vmatpush1.msra.mxu0 %v2105
        %2144 = vmatprep.subr.mxu0 0.0
        %2145 = vmatpush1.msra.mxu0 %v2106
        %2146 = vmatprep.subr.mxu0 0.0
        %2147 = vmatpush1.msra.mxu0 0.0
        %2148 = vmatprep.subr.mxu0 0.0
        %2149 = vmatpush1.msra.mxu0 0.0
        %2150 = vmatprep.subr.mxu0 0.0
        %2151 = vmatpush1.msra.mxu0 0.0
        %2152 = vmatprep.subr.mxu0 0.0
        %2153 = vmatpush1.msra.mxu0 0.0
        %2154 = vmatprep.subr.mxu0 0.0
        %2155 = vmatpush1.msra.mxu0 0.0
        %2156 = vmatprep.subr.mxu0 0.0
        %2157 = vmatpush1.msra.mxu0 0.0
        %2158 = vmatprep.subr.mxu0 0.0
        %2159 = vmatpush1.msra.mxu0 0.0
        %2160 = vmatprep.subr.mxu0 0.0
        %2161 = vmatpush1.msra.mxu0 0.0
        %2162 = vmatprep.subr.mxu0 0.0
        %2163 = vmatpush1.msra.mxu0 0.0
        %2164 = vmatprep.subr.mxu0 0.0
        %2165 = vmatpush1.msra.mxu0 0.0
        %2166 = vmatprep.subr.mxu0 0.0
        %2167 = vmatpush1.msra.mxu0 0.0
        %2168 = vmatprep.subr.mxu0 0.0
        %2169 = vmatpush1.msra.mxu0 0.0
        %2170 = vmatprep.subr.mxu0 0.0
        %2171 = vmatpush1.msra.mxu0 0.0
        %2172 = vmatprep.subr.mxu0 0.0
        %2173 = vmatpush1.msra.mxu0 0.0
        %2174 = vmatprep.subr.mxu0 0.0
        %2175 = vmatpush1.msra.mxu0 0.0
        %2176 = vmatprep.subr.mxu0 0.0
        %2177 = vmatpush1.msra.mxu0 0.0
        %2178 = vmatprep.mubr.f32.mxu0 0.0
        %2179 = vmatmul.mubr.f32.gmra.mrb[0].mxu0 %v2090
        %v2180 = vpop.f32.mrb[0].mxu0
        %v2181 = vadd.f32 %v2112, %v2180
        %v2182 = vpop.f32.mrb[0].mxu0
        %2183 = vdwg.mxu0
        %v2184 = vadd.f32 %v1972, %v2181
        %2185 = vst.msk [vmem:[%s681] sm:$0xff] %vm983, %v2184
        %s2186 = sand.u32 %s498, 1
        %s2187 = scalar_lea.sflag [#allocation6], %s2186
        %s2188 = sand.u32 %s498, 1
        %s2189 = smul.addr %s2188, 8
        %s2190 = scalar_lea.vmem [#allocation5], %s2189
        // Predicated region
        $region105: #{tpu_custom_call.1} parent=99 // pred_check
          %p2191 = pneg %p508
        $region106: #{tpu_custom_call.1} parent=99 // pred_check_branch
          %2193 = sbr.rel (%p2191) target = $region108
        $region107: #{tpu_custom_call.1} parent=99 // pred_region
          %s2195 = ssub.s32 128, 128
          %2196 = vsyncadd %s2187, %s2195
          %s2197 = sadd.s32 %s39, %s38
          %s2198 = smul.addr %s2197, 128
          %s2199 = scalar_lea.hbm %s20, %s2198
          %s2201 = sshll.u32 %s2190, 4
          %s2202 = int_to_ptr.vmem [resolvable:$true] %s2201
          %2204 = dma.vmem_to_hbm [thread:$0]  %s2202, 128, %s2199, %s2187
        $region108: #{tpu_custom_call.1} parent=99 // pred_fallthru
          _
      $region100: #{tpu_custom_call.1} parent=5 // pred_fallthru
        _
      %p2205 = scmp.le.s32.totalorder 2, %s29
      // Predicated region
      $region109: #{tpu_custom_call.1} parent=5 // pred_check
        %p2206 = pneg %p2205
      $region110: #{tpu_custom_call.1} parent=5 // pred_check_branch
        %2208 = sbr.rel (%p2206) target = $region112
      $region111: #{tpu_custom_call.1} parent=5 // pred_region
        %s2209 = ssub.s32 %s29, 2
        // Predicated region
        $region113: #{tpu_custom_call.1} parent=111 // pred_check
          %p2210 = pneg %p514
        $region114: #{tpu_custom_call.1} parent=111 // pred_check_branch
          %2212 = sbr.rel (%p2210) target = $region116
        $region115: #{tpu_custom_call.1} parent=111 // pred_region
          %s2213 = sand.u32 %s499, 1
          %s2214 = scalar_lea.sflag [#allocation6], %s2213
          %s2215 = sand.u32 %s499, 1
          %s2216 = smul.addr %s2215, 8
          %s2217 = scalar_lea.vmem [#allocation5], %s2216
          %2218 = dma.done %s2214, 128
        $region116: #{tpu_custom_call.1} parent=111 // pred_fallthru
          _
      $region112: #{tpu_custom_call.1} parent=5 // pred_fallthru
        _
    $region6: #{tpu_custom_call.1} parent=1 // loop_footer
      %s33 = sadd.s32 1, %s29
    $region7: #{tpu_custom_call.1} parent=1 // loop_footer_branch
      %28 = sbr.rel target = $region3
    $region8: #{tpu_custom_call.1} parent=1 // loop_exit
      _
    %2219 = vsyncpa [#allocation6], 1
    %s2220 = scalar_lea.sflag [#allocation6], 1
    %2221 = vsyncpa %s2220, 1

</llo_original>
